<compile_context>
chip_gen: v5e
topology: v5e:2x2
jax: 0.10.0
libtpu: 0.0.40
codegen_flags: <defaults>
</compile_context>

<pallas_src>
import numpy as np

import jax
import jax.numpy as jnp
from jax.experimental import pallas as pl
from jax.experimental.pallas import tpu as pltpu


# ----------------------------------------------------------------------------
# Host-side parameter construction
# ----------------------------------------------------------------------------
def _kaiming_conv(key, kh, kw, cin, cout):
    fan_in = kh * kw * cin
    std = (2.0 / fan_in) ** 0.5          # gain sqrt(2) for relu
    w = jax.random.normal(key, (kh, kw, cin, cout), jnp.float32) * std
    b = jnp.zeros((cout,), jnp.float32)
    return w, b


def _fold_bn(w, b, cout, eps=1e-5):
    # eval-mode BN with running_mean=0, running_var=1, gamma=1, beta=0
    gamma = jnp.ones((cout,), jnp.float32)
    beta = jnp.zeros((cout,), jnp.float32)
    mean = jnp.zeros((cout,), jnp.float32)
    var = jnp.ones((cout,), jnp.float32)
    scale = gamma / jnp.sqrt(var + eps)
    return w * scale, (b - mean) * scale + beta


def _band_weight(w, W):
    """(KH,KW,Cin,Cout) HWIO conv weight -> (KH, W*Cin, W*Cout) banded GEMM
    weight acting on width-flattened rows.  Horizontal 'same' padding is folded
    into the band (out-of-range taps are simply dropped)."""
    w = np.asarray(w, np.float32)
    KH, KW, Cin, Cout = w.shape
    pw = KW // 2
    band = np.zeros((KH, W * Cin, W * Cout), np.float32)
    for kh in range(KH):
        for w_out in range(W):
            for kw in range(KW):
                w_in = w_out + kw - pw
                if 0 <= w_in < W:
                    band[kh,
                         w_in * Cin:(w_in + 1) * Cin,
                         w_out * Cout:(w_out + 1) * Cout] = w[kh, kw]
    return band


def _upsample_mats(H, W, C):
    """Nearest-neighbour x2 upsample as two matmuls in (H, W*C) layout:
       x_up = R @ (x @ E)   with E: (W*C, 2W*C), R: (2H, H)."""
    E = np.zeros((W * C, 2 * W * C), np.float32)
    eye = np.eye(C, dtype=np.float32)
    for w in range(W):
        for d in (0, 1):
            E[w * C:(w + 1) * C, (2 * w + d) * C:(2 * w + d + 1) * C] = eye
    R = np.zeros((2 * H, H), np.float32)
    for h in range(H):
        R[2 * h, h] = 1.0
        R[2 * h + 1, h] = 1.0
    return E, R


def _const_index_map(ndim):
    return lambda i: (0,) * ndim


# ----------------------------------------------------------------------------
# Fused whole-generator kernel (built from a static per-layer plan)
# ----------------------------------------------------------------------------
def _build_kernel(plan):
    n_params = 2 * len(plan)

    def kernel(*refs):
        z_ref = refs[0]
        param_refs = refs[1:1 + n_params]
        o_ref = refs[1 + n_params]
        scratch_refs = refs[2 + n_params:]

        x = z_ref[0]                      # (H0, W0*Cin0) f32, lane-dense
        skip = None
        si = 0
        for idx, (kind, cfg) in enumerate(plan):
            a_ref = param_refs[2 * idx]
            b_ref = param_refs[2 * idx + 1]

            if kind == "up":
                # nearest x2: width expand (x @ E) then row expand (R @ .)
                cols = jnp.dot(x.astype(jnp.bfloat16), a_ref[...],
                               preferred_element_type=jnp.float32)
                x = jnp.dot(b_ref[...], cols.astype(jnp.bfloat16),
                            preferred_element_type=jnp.float32)
                continue

            # fused conv ('same') + folded BN + optional skip-add + activation
            H, W, Cout, KH = cfg["H"], cfg["W"], cfg["Cout"], cfg["KH"]
            ph = KH // 2
            if cfg["save_skip"]:
                skip = x

            pad_ref = scratch_refs[si]          # (H + 2*ph, W*Cin) f32
            si += 1
            pad_ref[...] = jnp.zeros_like(pad_ref)
            pad_ref[ph:ph + H, :] = x           # vertical 'same' padding

            acc = jnp.zeros((H, W * Cout), jnp.float32)
            for kh in range(KH):                # KH banded GEMMs, K = W*Cin
                slab = pad_ref[kh:kh + H, :].astype(jnp.bfloat16)
                acc = acc + jnp.dot(slab, a_ref[kh],
                                    preferred_element_type=jnp.float32)
            acc = acc + b_ref[...]              # (1, W*Cout) broadcast
            if cfg["add_skip"]:
                acc = acc + skip
            if cfg["act"] == "relu":
                acc = jnp.maximum(acc, 0.0)
            elif cfg["act"] == "tanh":
                acc = jnp.tanh(acc)
            x = acc

        o_ref[0] = x.astype(o_ref.dtype)

    return kernel


# ----------------------------------------------------------------------------
# Generator wrapper (PyTorch-style NCHW in / NCHW out)
# ----------------------------------------------------------------------------
class GeneratorPallas:
    initial_scale = 4

    def __init__(self, key, input_dim, z_dim, filters,
                 activation="relu", final_activation="tanh"):
        assert final_activation in ("tanh", "none")
        assert activation == "relu"

        n_stage = len(filters) - 1
        keys = jax.random.split(key, 2 + 3 * n_stage)
        ki = iter(keys)

        plan, params, scratch = [], [], []

        def add_conv(w, b, H, W, act, save_skip=False, add_skip=False):
            KH, KW, Cin, Cout = w.shape
            band = _band_weight(w, W)
            bias = np.tile(np.asarray(b, np.float32), W).reshape(1, W * Cout)
            plan.append(("conv", dict(H=H, W=W, Cout=Cout, KH=KH, act=act,
                                      save_skip=save_skip, add_skip=add_skip)))
            params.append(jnp.asarray(band, jnp.bfloat16))
            params.append(jnp.asarray(bias, jnp.float32))
            scratch.append(pltpu.VMEM((H + 2 * (KH // 2), W * Cin), jnp.float32))

        def add_up(H, W, C):
            E, R = _upsample_mats(H, W, C)
            plan.append(("up", None))
            params.append(jnp.asarray(E, jnp.bfloat16))
            params.append(jnp.asarray(R, jnp.bfloat16))

        H = W = self.initial_scale

        # conv1 = ConvBlock(z_dim, filters[0]): conv3x3 -> BN -> act
        w, b = _kaiming_conv(next(ki), 3, 3, z_dim, filters[0])
        w, b = _fold_bn(w, b, filters[0])
        add_conv(w, b, H, W, activation)

        # module_list: UpsampleBlock + ResidualBlock per stage
        for i in range(1, len(filters)):
            cin, cout = filters[i - 1], filters[i]
            add_up(H, W, cin)
            H, W = 2 * H, 2 * W
            uw, ub = _kaiming_conv(next(ki), 3, 3, cin, cout)
            uw, ub = _fold_bn(uw, ub, cout)
            add_conv(uw, ub, H, W, activation)
            r1w, r1b = _kaiming_conv(next(ki), 3, 3, cout, cout)
            r1w, r1b = _fold_bn(r1w, r1b, cout)
            add_conv(r1w, r1b, H, W, activation, save_skip=True)
            r2w, r2b = _kaiming_conv(next(ki), 3, 3, cout, cout)
            r2w, r2b = _fold_bn(r2w, r2b, cout)
            add_conv(r2w, r2b, H, W, activation, add_skip=True)

        # final = conv5x5(filters[-1], input_dim) (+ tanh)
        fw, fb = _kaiming_conv(next(ki), 5, 5, filters[-1], input_dim)
        fin_act = "tanh" if final_activation == "tanh" else "none"
        add_conv(fw, fb, H, W, fin_act)

        self.plan = plan
        self.params = params
        self.scratch = scratch
        self.z_dim = z_dim
        self.out_C = input_dim
        self.out_H = H
        self.out_W = W
        self._kernel = _build_kernel(plan)

    def forward(self, z_nchw):
        B, C, H0, W0 = z_nchw.shape
        assert C == self.z_dim
        assert H0 == self.initial_scale and W0 == self.initial_scale

        # NCHW -> lane-dense (B, H, W*C) layout
        x = jnp.transpose(z_nchw.astype(jnp.float32), (0, 2, 3, 1))
        x = x.reshape(B, H0, W0 * C)

        Hc, Wc = self.out_H, self.out_W * self.out_C
        in_specs = [pl.BlockSpec((1, H0, W0 * C), lambda i: (i, 0, 0))]
        for p in self.params:
            in_specs.append(pl.BlockSpec(p.shape, _const_index_map(p.ndim)))

        out = pl.pallas_call(
            self._kernel,
            out_shape=jax.ShapeDtypeStruct((B, Hc, Wc), jnp.float32),
            grid=(B,),
            in_specs=in_specs,
            out_specs=pl.BlockSpec((1, Hc, Wc), lambda i: (i, 0, 0)),
            scratch_shapes=list(self.scratch),
            compiler_params=pltpu.CompilerParams(
                dimension_semantics=("parallel",)),
        )(x, *self.params)

        out = out.reshape(B, self.out_H, self.out_W, self.out_C)
        return jnp.transpose(out, (0, 3, 1, 2))      # -> NCHW


# TODO(synk): training-mode BatchNorm (per-batch statistics) is not reproduced;
#             eval-mode BN with default running stats is folded into the convs.

if __name__ == "__main__":
    key = jax.random.PRNGKey(0)
    k_param, k_z = jax.random.split(key)

    batch = 2
    z_dim = 8
    filters = [16, 8]
    input_dim = 3
    s = GeneratorPallas.initial_scale          # 4x4 latent spatial grid

    gen = GeneratorPallas(k_param, input_dim=input_dim, z_dim=z_dim,
                          filters=filters, activation="relu",
                          final_activation="tanh")

    z = jax.random.normal(k_z, (batch, z_dim, s, s), jnp.float32)   # NCHW
    out = jax.block_until_ready(gen.forward(z))

    side = s * (2 ** (len(filters) - 1))
    expected = (batch, input_dim, side, side)
    assert out.shape == expected, (out.shape, expected)
    assert bool(jnp.all(jnp.isfinite(out)))
    assert bool(jnp.all(jnp.abs(out) <= 1.0 + 1e-6))   # tanh range
    print("KERNEL_OK")
</pallas_src>

<mosaic_0001>
module attributes {stable_mosaic.version = 11 : i64} {
  func.func @kernel(%arg0: i32, %arg1: memref<1x4x32xf32, #tpu.memory_space<vmem>>, %arg2: memref<3x32x64xbf16, #tpu.memory_space<vmem>>, %arg3: memref<1x64xf32, #tpu.memory_space<vmem>>, %arg4: memref<64x128xbf16, #tpu.memory_space<vmem>>, %arg5: memref<8x4xbf16, #tpu.memory_space<vmem>>, %arg6: memref<3x128x64xbf16, #tpu.memory_space<vmem>>, %arg7: memref<1x64xf32, #tpu.memory_space<vmem>>, %arg8: memref<3x64x64xbf16, #tpu.memory_space<vmem>>, %arg9: memref<1x64xf32, #tpu.memory_space<vmem>>, %arg10: memref<3x64x64xbf16, #tpu.memory_space<vmem>>, %arg11: memref<1x64xf32, #tpu.memory_space<vmem>>, %arg12: memref<5x64x24xbf16, #tpu.memory_space<vmem>>, %arg13: memref<1x24xf32, #tpu.memory_space<vmem>>, %arg14: memref<1x8x24xf32, #tpu.memory_space<vmem>>, %arg15: memref<6x32xf32, #tpu.memory_space<vmem>>, %arg16: memref<10x128xf32, #tpu.memory_space<vmem>>, %arg17: memref<10x64xf32, #tpu.memory_space<vmem>>, %arg18: memref<10x64xf32, #tpu.memory_space<vmem>>, %arg19: memref<12x64xf32, #tpu.memory_space<vmem>>) attributes {dimension_semantics = [#tpu.dimension_semantics<parallel>], iteration_bounds = array<i64: 2>, scalar_prefetch = 0 : i64, scratch_operands = 5 : i64, tpu.core_type = #tpu.core_type<tc>, window_params = [{transform_indices = @transform_0, window_bounds = array<i64: 1, 4, 32>}, {pipeline_mode = #tpu.pipeline_mode<synchronous>, transform_indices = @transform_1, window_bounds = array<i64: 3, 32, 64>}, {pipeline_mode = #tpu.pipeline_mode<synchronous>, transform_indices = @transform_2, window_bounds = array<i64: 1, 64>}, {pipeline_mode = #tpu.pipeline_mode<synchronous>, transform_indices = @transform_3, window_bounds = array<i64: 64, 128>}, {pipeline_mode = #tpu.pipeline_mode<synchronous>, transform_indices = @transform_4, window_bounds = array<i64: 8, 4>}, {pipeline_mode = #tpu.pipeline_mode<synchronous>, transform_indices = @transform_5, window_bounds = array<i64: 3, 128, 64>}, {pipeline_mode = #tpu.pipeline_mode<synchronous>, transform_indices = @transform_6, window_bounds = array<i64: 1, 64>}, {pipeline_mode = #tpu.pipeline_mode<synchronous>, transform_indices = @transform_7, window_bounds = array<i64: 3, 64, 64>}, {pipeline_mode = #tpu.pipeline_mode<synchronous>, transform_indices = @transform_8, window_bounds = array<i64: 1, 64>}, {pipeline_mode = #tpu.pipeline_mode<synchronous>, transform_indices = @transform_9, window_bounds = array<i64: 3, 64, 64>}, {pipeline_mode = #tpu.pipeline_mode<synchronous>, transform_indices = @transform_10, window_bounds = array<i64: 1, 64>}, {pipeline_mode = #tpu.pipeline_mode<synchronous>, transform_indices = @transform_11, window_bounds = array<i64: 5, 64, 24>}, {pipeline_mode = #tpu.pipeline_mode<synchronous>, transform_indices = @transform_12, window_bounds = array<i64: 1, 24>}, {transform_indices = @transform_13, window_bounds = array<i64: 1, 8, 24>}]} {
    %c0 = arith.constant 0 : index
    %c0_0 = arith.constant 0 : index
    %c0_1 = arith.constant 0 : index
    %0 = vector.load %arg1[%c0, %c0_0, %c0_1] : memref<1x4x32xf32, #tpu.memory_space<vmem>>, vector<1x4x32xf32>
    %1 = vector.shape_cast %0 : vector<1x4x32xf32> to vector<4x32xf32>
    %cst = arith.constant 0.000000e+00 : f32
    %2 = vector.broadcast %cst : f32 to vector<6x32xf32>
    %c0_2 = arith.constant 0 : index
    %c0_3 = arith.constant 0 : index
    %3 = vector.load %arg15[%c0_2, %c0_3] : memref<6x32xf32, #tpu.memory_space<vmem>>, vector<6x32xf32>
    tpu.vector_store %arg15[%c0_2, %c0_3], %2 {strides = array<i32>} : memref<6x32xf32, #tpu.memory_space<vmem>>, vector<6x32xf32>,
    %c1 = arith.constant 1 : index
    %c0_4 = arith.constant 0 : index
    %4 = vector.load %arg15[%c1, %c0_4] : memref<6x32xf32, #tpu.memory_space<vmem>>, vector<4x32xf32>
    tpu.vector_store %arg15[%c1, %c0_4], %1 {strides = array<i32>} : memref<6x32xf32, #tpu.memory_space<vmem>>, vector<4x32xf32>,
    %cst_5 = arith.constant 0.000000e+00 : f32
    %5 = vector.broadcast %cst_5 : f32 to vector<4x64xf32>
    %c0_6 = arith.constant 0 : index
    %c0_7 = arith.constant 0 : index
    %6 = vector.load %arg15[%c0_6, %c0_7] : memref<6x32xf32, #tpu.memory_space<vmem>>, vector<4x32xf32>
    %7 = arith.truncf %6 : vector<4x32xf32> to vector<4x32xbf16>
    %c0_8 = arith.constant 0 : index
    %c0_9 = arith.constant 0 : index
    %c0_10 = arith.constant 0 : index
    %8 = vector.load %arg2[%c0_8, %c0_9, %c0_10] : memref<3x32x64xbf16, #tpu.memory_space<vmem>>, vector<1x32x64xbf16>
    %9 = vector.shape_cast %8 : vector<1x32x64xbf16> to vector<32x64xbf16>
    %cst_11 = arith.constant dense<0.000000e+00> : vector<4x64xf32>
    %10 = tpu.matmul %7, %9, %cst_11 {dimension_numbers = #tpu.dot_dimension_numbers<[1], [0], [0], [1], [0, 0, 1, 1], [], []>} : vector<4x32xbf16>, vector<32x64xbf16>, vector<4x64xf32> -> vector<4x64xf32>
    %11 = arith.addf %5, %10 : vector<4x64xf32>
    %c1_12 = arith.constant 1 : index
    %c0_13 = arith.constant 0 : index
    %12 = vector.load %arg15[%c1_12, %c0_13] : memref<6x32xf32, #tpu.memory_space<vmem>>, vector<4x32xf32>
    %13 = arith.truncf %12 : vector<4x32xf32> to vector<4x32xbf16>
    %c1_14 = arith.constant 1 : index
    %c0_15 = arith.constant 0 : index
    %c0_16 = arith.constant 0 : index
    %14 = vector.load %arg2[%c1_14, %c0_15, %c0_16] : memref<3x32x64xbf16, #tpu.memory_space<vmem>>, vector<1x32x64xbf16>
    %15 = vector.shape_cast %14 : vector<1x32x64xbf16> to vector<32x64xbf16>
    %cst_17 = arith.constant dense<0.000000e+00> : vector<4x64xf32>
    %16 = tpu.matmul %13, %15, %cst_17 {dimension_numbers = #tpu.dot_dimension_numbers<[1], [0], [0], [1], [0, 0, 1, 1], [], []>} : vector<4x32xbf16>, vector<32x64xbf16>, vector<4x64xf32> -> vector<4x64xf32>
    %17 = arith.addf %11, %16 : vector<4x64xf32>
    %c2 = arith.constant 2 : index
    %c0_18 = arith.constant 0 : index
    %18 = vector.load %arg15[%c2, %c0_18] : memref<6x32xf32, #tpu.memory_space<vmem>>, vector<4x32xf32>
    %19 = arith.truncf %18 : vector<4x32xf32> to vector<4x32xbf16>
    %c2_19 = arith.constant 2 : index
    %c0_20 = arith.constant 0 : index
    %c0_21 = arith.constant 0 : index
    %20 = vector.load %arg2[%c2_19, %c0_20, %c0_21] : memref<3x32x64xbf16, #tpu.memory_space<vmem>>, vector<1x32x64xbf16>
    %21 = vector.shape_cast %20 : vector<1x32x64xbf16> to vector<32x64xbf16>
    %cst_22 = arith.constant dense<0.000000e+00> : vector<4x64xf32>
    %22 = tpu.matmul %19, %21, %cst_22 {dimension_numbers = #tpu.dot_dimension_numbers<[1], [0], [0], [1], [0, 0, 1, 1], [], []>} : vector<4x32xbf16>, vector<32x64xbf16>, vector<4x64xf32> -> vector<4x64xf32>
    %23 = arith.addf %17, %22 : vector<4x64xf32>
    %c0_23 = arith.constant 0 : index
    %c0_24 = arith.constant 0 : index
    %24 = vector.load %arg3[%c0_23, %c0_24] : memref<1x64xf32, #tpu.memory_space<vmem>>, vector<1x64xf32>
    %25 = vector.broadcast %24 : vector<1x64xf32> to vector<4x64xf32>
    %26 = arith.addf %23, %25 : vector<4x64xf32>
    %cst_25 = arith.constant 0.000000e+00 : f32
    %27 = vector.broadcast %cst_25 : f32 to vector<4x64xf32>
    %28 = arith.maximumf %26, %27 : vector<4x64xf32>
    %29 = arith.truncf %28 : vector<4x64xf32> to vector<4x64xbf16>
    %c0_26 = arith.constant 0 : index
    %c0_27 = arith.constant 0 : index
    %30 = vector.load %arg4[%c0_26, %c0_27] : memref<64x128xbf16, #tpu.memory_space<vmem>>, vector<64x128xbf16>
    %cst_28 = arith.constant dense<0.000000e+00> : vector<4x128xf32>
    %31 = tpu.matmul %29, %30, %cst_28 {dimension_numbers = #tpu.dot_dimension_numbers<[1], [0], [0], [1], [0, 0, 1, 1], [], []>} : vector<4x64xbf16>, vector<64x128xbf16>, vector<4x128xf32> -> vector<4x128xf32>
    %c0_29 = arith.constant 0 : index
    %c0_30 = arith.constant 0 : index
    %32 = vector.load %arg5[%c0_29, %c0_30] : memref<8x4xbf16, #tpu.memory_space<vmem>>, vector<8x4xbf16>
    %33 = arith.truncf %31 : vector<4x128xf32> to vector<4x128xbf16>
    %cst_31 = arith.constant dense<0.000000e+00> : vector<8x128xf32>
    %34 = tpu.matmul %32, %33, %cst_31 {dimension_numbers = #tpu.dot_dimension_numbers<[1], [0], [0], [1], [0, 0, 1, 1], [], []>} : vector<8x4xbf16>, vector<4x128xbf16>, vector<8x128xf32> -> vector<8x128xf32>
    %cst_32 = arith.constant 0.000000e+00 : f32
    %35 = vector.broadcast %cst_32 : f32 to vector<10x128xf32>
    %c0_33 = arith.constant 0 : index
    %c0_34 = arith.constant 0 : index
    %36 = vector.load %arg16[%c0_33, %c0_34] : memref<10x128xf32, #tpu.memory_space<vmem>>, vector<10x128xf32>
    tpu.vector_store %arg16[%c0_33, %c0_34], %35 {strides = array<i32>} : memref<10x128xf32, #tpu.memory_space<vmem>>, vector<10x128xf32>,
    %c1_35 = arith.constant 1 : index
    %c0_36 = arith.constant 0 : index
    %37 = vector.load %arg16[%c1_35, %c0_36] : memref<10x128xf32, #tpu.memory_space<vmem>>, vector<8x128xf32>
    tpu.vector_store %arg16[%c1_35, %c0_36], %34 {strides = array<i32>} : memref<10x128xf32, #tpu.memory_space<vmem>>, vector<8x128xf32>,
    %cst_37 = arith.constant 0.000000e+00 : f32
    %38 = vector.broadcast %cst_37 : f32 to vector<8x64xf32>
    %c0_38 = arith.constant 0 : index
    %c0_39 = arith.constant 0 : index
    %39 = vector.load %arg16[%c0_38, %c0_39] : memref<10x128xf32, #tpu.memory_space<vmem>>, vector<8x128xf32>
    %40 = arith.truncf %39 : vector<8x128xf32> to vector<8x128xbf16>
    %c0_40 = arith.constant 0 : index
    %c0_41 = arith.constant 0 : index
    %c0_42 = arith.constant 0 : index
    %41 = vector.load %arg6[%c0_40, %c0_41, %c0_42] : memref<3x128x64xbf16, #tpu.memory_space<vmem>>, vector<1x128x64xbf16>
    %42 = vector.shape_cast %41 : vector<1x128x64xbf16> to vector<128x64xbf16>
    %cst_43 = arith.constant dense<0.000000e+00> : vector<8x64xf32>
    %43 = tpu.matmul %40, %42, %cst_43 {dimension_numbers = #tpu.dot_dimension_numbers<[1], [0], [0], [1], [0, 0, 1, 1], [], []>} : vector<8x128xbf16>, vector<128x64xbf16>, vector<8x64xf32> -> vector<8x64xf32>
    %44 = arith.addf %38, %43 : vector<8x64xf32>
    %c1_44 = arith.constant 1 : index
    %c0_45 = arith.constant 0 : index
    %45 = vector.load %arg16[%c1_44, %c0_45] : memref<10x128xf32, #tpu.memory_space<vmem>>, vector<8x128xf32>
    %46 = arith.truncf %45 : vector<8x128xf32> to vector<8x128xbf16>
    %c1_46 = arith.constant 1 : index
    %c0_47 = arith.constant 0 : index
    %c0_48 = arith.constant 0 : index
    %47 = vector.load %arg6[%c1_46, %c0_47, %c0_48] : memref<3x128x64xbf16, #tpu.memory_space<vmem>>, vector<1x128x64xbf16>
    %48 = vector.shape_cast %47 : vector<1x128x64xbf16> to vector<128x64xbf16>
    %cst_49 = arith.constant dense<0.000000e+00> : vector<8x64xf32>
    %49 = tpu.matmul %46, %48, %cst_49 {dimension_numbers = #tpu.dot_dimension_numbers<[1], [0], [0], [1], [0, 0, 1, 1], [], []>} : vector<8x128xbf16>, vector<128x64xbf16>, vector<8x64xf32> -> vector<8x64xf32>
    %50 = arith.addf %44, %49 : vector<8x64xf32>
    %c2_50 = arith.constant 2 : index
    %c0_51 = arith.constant 0 : index
    %51 = vector.load %arg16[%c2_50, %c0_51] : memref<10x128xf32, #tpu.memory_space<vmem>>, vector<8x128xf32>
    %52 = arith.truncf %51 : vector<8x128xf32> to vector<8x128xbf16>
    %c2_52 = arith.constant 2 : index
    %c0_53 = arith.constant 0 : index
    %c0_54 = arith.constant 0 : index
    %53 = vector.load %arg6[%c2_52, %c0_53, %c0_54] : memref<3x128x64xbf16, #tpu.memory_space<vmem>>, vector<1x128x64xbf16>
    %54 = vector.shape_cast %53 : vector<1x128x64xbf16> to vector<128x64xbf16>
    %cst_55 = arith.constant dense<0.000000e+00> : vector<8x64xf32>
    %55 = tpu.matmul %52, %54, %cst_55 {dimension_numbers = #tpu.dot_dimension_numbers<[1], [0], [0], [1], [0, 0, 1, 1], [], []>} : vector<8x128xbf16>, vector<128x64xbf16>, vector<8x64xf32> -> vector<8x64xf32>
    %56 = arith.addf %50, %55 : vector<8x64xf32>
    %c0_56 = arith.constant 0 : index
    %c0_57 = arith.constant 0 : index
    %57 = vector.load %arg7[%c0_56, %c0_57] : memref<1x64xf32, #tpu.memory_space<vmem>>, vector<1x64xf32>
    %58 = vector.broadcast %57 : vector<1x64xf32> to vector<8x64xf32>
    %59 = arith.addf %56, %58 : vector<8x64xf32>
    %cst_58 = arith.constant 0.000000e+00 : f32
    %60 = vector.broadcast %cst_58 : f32 to vector<8x64xf32>
    %61 = arith.maximumf %59, %60 : vector<8x64xf32>
    %cst_59 = arith.constant 0.000000e+00 : f32
    %62 = vector.broadcast %cst_59 : f32 to vector<10x64xf32>
    %c0_60 = arith.constant 0 : index
    %c0_61 = arith.constant 0 : index
    %63 = vector.load %arg17[%c0_60, %c0_61] : memref<10x64xf32, #tpu.memory_space<vmem>>, vector<10x64xf32>
    tpu.vector_store %arg17[%c0_60, %c0_61], %62 {strides = array<i32>} : memref<10x64xf32, #tpu.memory_space<vmem>>, vector<10x64xf32>,
    %c1_62 = arith.constant 1 : index
    %c0_63 = arith.constant 0 : index
    %64 = vector.load %arg17[%c1_62, %c0_63] : memref<10x64xf32, #tpu.memory_space<vmem>>, vector<8x64xf32>
    tpu.vector_store %arg17[%c1_62, %c0_63], %61 {strides = array<i32>} : memref<10x64xf32, #tpu.memory_space<vmem>>, vector<8x64xf32>,
    %cst_64 = arith.constant 0.000000e+00 : f32
    %65 = vector.broadcast %cst_64 : f32 to vector<8x64xf32>
    %c0_65 = arith.constant 0 : index
    %c0_66 = arith.constant 0 : index
    %66 = vector.load %arg17[%c0_65, %c0_66] : memref<10x64xf32, #tpu.memory_space<vmem>>, vector<8x64xf32>
    %67 = arith.truncf %66 : vector<8x64xf32> to vector<8x64xbf16>
    %c0_67 = arith.constant 0 : index
    %c0_68 = arith.constant 0 : index
    %c0_69 = arith.constant 0 : index
    %68 = vector.load %arg8[%c0_67, %c0_68, %c0_69] : memref<3x64x64xbf16, #tpu.memory_space<vmem>>, vector<1x64x64xbf16>
    %69 = vector.shape_cast %68 : vector<1x64x64xbf16> to vector<64x64xbf16>
    %cst_70 = arith.constant dense<0.000000e+00> : vector<8x64xf32>
    %70 = tpu.matmul %67, %69, %cst_70 {dimension_numbers = #tpu.dot_dimension_numbers<[1], [0], [0], [1], [0, 0, 1, 1], [], []>} : vector<8x64xbf16>, vector<64x64xbf16>, vector<8x64xf32> -> vector<8x64xf32>
    %71 = arith.addf %65, %70 : vector<8x64xf32>
    %c1_71 = arith.constant 1 : index
    %c0_72 = arith.constant 0 : index
    %72 = vector.load %arg17[%c1_71, %c0_72] : memref<10x64xf32, #tpu.memory_space<vmem>>, vector<8x64xf32>
    %73 = arith.truncf %72 : vector<8x64xf32> to vector<8x64xbf16>
    %c1_73 = arith.constant 1 : index
    %c0_74 = arith.constant 0 : index
    %c0_75 = arith.constant 0 : index
    %74 = vector.load %arg8[%c1_73, %c0_74, %c0_75] : memref<3x64x64xbf16, #tpu.memory_space<vmem>>, vector<1x64x64xbf16>
    %75 = vector.shape_cast %74 : vector<1x64x64xbf16> to vector<64x64xbf16>
    %cst_76 = arith.constant dense<0.000000e+00> : vector<8x64xf32>
    %76 = tpu.matmul %73, %75, %cst_76 {dimension_numbers = #tpu.dot_dimension_numbers<[1], [0], [0], [1], [0, 0, 1, 1], [], []>} : vector<8x64xbf16>, vector<64x64xbf16>, vector<8x64xf32> -> vector<8x64xf32>
    %77 = arith.addf %71, %76 : vector<8x64xf32>
    %c2_77 = arith.constant 2 : index
    %c0_78 = arith.constant 0 : index
    %78 = vector.load %arg17[%c2_77, %c0_78] : memref<10x64xf32, #tpu.memory_space<vmem>>, vector<8x64xf32>
    %79 = arith.truncf %78 : vector<8x64xf32> to vector<8x64xbf16>
    %c2_79 = arith.constant 2 : index
    %c0_80 = arith.constant 0 : index
    %c0_81 = arith.constant 0 : index
    %80 = vector.load %arg8[%c2_79, %c0_80, %c0_81] : memref<3x64x64xbf16, #tpu.memory_space<vmem>>, vector<1x64x64xbf16>
    %81 = vector.shape_cast %80 : vector<1x64x64xbf16> to vector<64x64xbf16>
    %cst_82 = arith.constant dense<0.000000e+00> : vector<8x64xf32>
    %82 = tpu.matmul %79, %81, %cst_82 {dimension_numbers = #tpu.dot_dimension_numbers<[1], [0], [0], [1], [0, 0, 1, 1], [], []>} : vector<8x64xbf16>, vector<64x64xbf16>, vector<8x64xf32> -> vector<8x64xf32>
    %83 = arith.addf %77, %82 : vector<8x64xf32>
    %c0_83 = arith.constant 0 : index
    %c0_84 = arith.constant 0 : index
    %84 = vector.load %arg9[%c0_83, %c0_84] : memref<1x64xf32, #tpu.memory_space<vmem>>, vector<1x64xf32>
    %85 = vector.broadcast %84 : vector<1x64xf32> to vector<8x64xf32>
    %86 = arith.addf %83, %85 : vector<8x64xf32>
    %cst_85 = arith.constant 0.000000e+00 : f32
    %87 = vector.broadcast %cst_85 : f32 to vector<8x64xf32>
    %88 = arith.maximumf %86, %87 : vector<8x64xf32>
    %cst_86 = arith.constant 0.000000e+00 : f32
    %89 = vector.broadcast %cst_86 : f32 to vector<10x64xf32>
    %c0_87 = arith.constant 0 : index
    %c0_88 = arith.constant 0 : index
    %90 = vector.load %arg18[%c0_87, %c0_88] : memref<10x64xf32, #tpu.memory_space<vmem>>, vector<10x64xf32>
    tpu.vector_store %arg18[%c0_87, %c0_88], %89 {strides = array<i32>} : memref<10x64xf32, #tpu.memory_space<vmem>>, vector<10x64xf32>,
    %c1_89 = arith.constant 1 : index
    %c0_90 = arith.constant 0 : index
    %91 = vector.load %arg18[%c1_89, %c0_90] : memref<10x64xf32, #tpu.memory_space<vmem>>, vector<8x64xf32>
    tpu.vector_store %arg18[%c1_89, %c0_90], %88 {strides = array<i32>} : memref<10x64xf32, #tpu.memory_space<vmem>>, vector<8x64xf32>,
    %cst_91 = arith.constant 0.000000e+00 : f32
    %92 = vector.broadcast %cst_91 : f32 to vector<8x64xf32>
    %c0_92 = arith.constant 0 : index
    %c0_93 = arith.constant 0 : index
    %93 = vector.load %arg18[%c0_92, %c0_93] : memref<10x64xf32, #tpu.memory_space<vmem>>, vector<8x64xf32>
    %94 = arith.truncf %93 : vector<8x64xf32> to vector<8x64xbf16>
    %c0_94 = arith.constant 0 : index
    %c0_95 = arith.constant 0 : index
    %c0_96 = arith.constant 0 : index
    %95 = vector.load %arg10[%c0_94, %c0_95, %c0_96] : memref<3x64x64xbf16, #tpu.memory_space<vmem>>, vector<1x64x64xbf16>
    %96 = vector.shape_cast %95 : vector<1x64x64xbf16> to vector<64x64xbf16>
    %cst_97 = arith.constant dense<0.000000e+00> : vector<8x64xf32>
    %97 = tpu.matmul %94, %96, %cst_97 {dimension_numbers = #tpu.dot_dimension_numbers<[1], [0], [0], [1], [0, 0, 1, 1], [], []>} : vector<8x64xbf16>, vector<64x64xbf16>, vector<8x64xf32> -> vector<8x64xf32>
    %98 = arith.addf %92, %97 : vector<8x64xf32>
    %c1_98 = arith.constant 1 : index
    %c0_99 = arith.constant 0 : index
    %99 = vector.load %arg18[%c1_98, %c0_99] : memref<10x64xf32, #tpu.memory_space<vmem>>, vector<8x64xf32>
    %100 = arith.truncf %99 : vector<8x64xf32> to vector<8x64xbf16>
    %c1_100 = arith.constant 1 : index
    %c0_101 = arith.constant 0 : index
    %c0_102 = arith.constant 0 : index
    %101 = vector.load %arg10[%c1_100, %c0_101, %c0_102] : memref<3x64x64xbf16, #tpu.memory_space<vmem>>, vector<1x64x64xbf16>
    %102 = vector.shape_cast %101 : vector<1x64x64xbf16> to vector<64x64xbf16>
    %cst_103 = arith.constant dense<0.000000e+00> : vector<8x64xf32>
    %103 = tpu.matmul %100, %102, %cst_103 {dimension_numbers = #tpu.dot_dimension_numbers<[1], [0], [0], [1], [0, 0, 1, 1], [], []>} : vector<8x64xbf16>, vector<64x64xbf16>, vector<8x64xf32> -> vector<8x64xf32>
    %104 = arith.addf %98, %103 : vector<8x64xf32>
    %c2_104 = arith.constant 2 : index
    %c0_105 = arith.constant 0 : index
    %105 = vector.load %arg18[%c2_104, %c0_105] : memref<10x64xf32, #tpu.memory_space<vmem>>, vector<8x64xf32>
    %106 = arith.truncf %105 : vector<8x64xf32> to vector<8x64xbf16>
    %c2_106 = arith.constant 2 : index
    %c0_107 = arith.constant 0 : index
    %c0_108 = arith.constant 0 : index
    %107 = vector.load %arg10[%c2_106, %c0_107, %c0_108] : memref<3x64x64xbf16, #tpu.memory_space<vmem>>, vector<1x64x64xbf16>
    %108 = vector.shape_cast %107 : vector<1x64x64xbf16> to vector<64x64xbf16>
    %cst_109 = arith.constant dense<0.000000e+00> : vector<8x64xf32>
    %109 = tpu.matmul %106, %108, %cst_109 {dimension_numbers = #tpu.dot_dimension_numbers<[1], [0], [0], [1], [0, 0, 1, 1], [], []>} : vector<8x64xbf16>, vector<64x64xbf16>, vector<8x64xf32> -> vector<8x64xf32>
    %110 = arith.addf %104, %109 : vector<8x64xf32>
    %c0_110 = arith.constant 0 : index
    %c0_111 = arith.constant 0 : index
    %111 = vector.load %arg11[%c0_110, %c0_111] : memref<1x64xf32, #tpu.memory_space<vmem>>, vector<1x64xf32>
    %112 = vector.broadcast %111 : vector<1x64xf32> to vector<8x64xf32>
    %113 = arith.addf %110, %112 : vector<8x64xf32>
    %114 = arith.addf %113, %61 : vector<8x64xf32>
    %cst_112 = arith.constant 0.000000e+00 : f32
    %115 = vector.broadcast %cst_112 : f32 to vector<8x64xf32>
    %116 = arith.maximumf %114, %115 : vector<8x64xf32>
    %cst_113 = arith.constant 0.000000e+00 : f32
    %117 = vector.broadcast %cst_113 : f32 to vector<12x64xf32>
    %c0_114 = arith.constant 0 : index
    %c0_115 = arith.constant 0 : index
    %118 = vector.load %arg19[%c0_114, %c0_115] : memref<12x64xf32, #tpu.memory_space<vmem>>, vector<12x64xf32>
    tpu.vector_store %arg19[%c0_114, %c0_115], %117 {strides = array<i32>} : memref<12x64xf32, #tpu.memory_space<vmem>>, vector<12x64xf32>,
    %c2_116 = arith.constant 2 : index
    %c0_117 = arith.constant 0 : index
    %119 = vector.load %arg19[%c2_116, %c0_117] : memref<12x64xf32, #tpu.memory_space<vmem>>, vector<8x64xf32>
    tpu.vector_store %arg19[%c2_116, %c0_117], %116 {strides = array<i32>} : memref<12x64xf32, #tpu.memory_space<vmem>>, vector<8x64xf32>,
    %cst_118 = arith.constant 0.000000e+00 : f32
    %120 = vector.broadcast %cst_118 : f32 to vector<8x24xf32>
    %c0_119 = arith.constant 0 : index
    %c0_120 = arith.constant 0 : index
    %121 = vector.load %arg19[%c0_119, %c0_120] : memref<12x64xf32, #tpu.memory_space<vmem>>, vector<8x64xf32>
    %122 = arith.truncf %121 : vector<8x64xf32> to vector<8x64xbf16>
    %c0_121 = arith.constant 0 : index
    %c0_122 = arith.constant 0 : index
    %c0_123 = arith.constant 0 : index
    %123 = vector.load %arg12[%c0_121, %c0_122, %c0_123] : memref<5x64x24xbf16, #tpu.memory_space<vmem>>, vector<1x64x24xbf16>
    %124 = vector.shape_cast %123 : vector<1x64x24xbf16> to vector<64x24xbf16>
    %cst_124 = arith.constant dense<0.000000e+00> : vector<8x24xf32>
    %125 = tpu.matmul %122, %124, %cst_124 {dimension_numbers = #tpu.dot_dimension_numbers<[1], [0], [0], [1], [0, 0, 1, 1], [], []>} : vector<8x64xbf16>, vector<64x24xbf16>, vector<8x24xf32> -> vector<8x24xf32>
    %126 = arith.addf %120, %125 : vector<8x24xf32>
    %c1_125 = arith.constant 1 : index
    %c0_126 = arith.constant 0 : index
    %127 = vector.load %arg19[%c1_125, %c0_126] : memref<12x64xf32, #tpu.memory_space<vmem>>, vector<8x64xf32>
    %128 = arith.truncf %127 : vector<8x64xf32> to vector<8x64xbf16>
    %c1_127 = arith.constant 1 : index
    %c0_128 = arith.constant 0 : index
    %c0_129 = arith.constant 0 : index
    %129 = vector.load %arg12[%c1_127, %c0_128, %c0_129] : memref<5x64x24xbf16, #tpu.memory_space<vmem>>, vector<1x64x24xbf16>
    %130 = vector.shape_cast %129 : vector<1x64x24xbf16> to vector<64x24xbf16>
    %cst_130 = arith.constant dense<0.000000e+00> : vector<8x24xf32>
    %131 = tpu.matmul %128, %130, %cst_130 {dimension_numbers = #tpu.dot_dimension_numbers<[1], [0], [0], [1], [0, 0, 1, 1], [], []>} : vector<8x64xbf16>, vector<64x24xbf16>, vector<8x24xf32> -> vector<8x24xf32>
    %132 = arith.addf %126, %131 : vector<8x24xf32>
    %c2_131 = arith.constant 2 : index
    %c0_132 = arith.constant 0 : index
    %133 = vector.load %arg19[%c2_131, %c0_132] : memref<12x64xf32, #tpu.memory_space<vmem>>, vector<8x64xf32>
    %134 = arith.truncf %133 : vector<8x64xf32> to vector<8x64xbf16>
    %c2_133 = arith.constant 2 : index
    %c0_134 = arith.constant 0 : index
    %c0_135 = arith.constant 0 : index
    %135 = vector.load %arg12[%c2_133, %c0_134, %c0_135] : memref<5x64x24xbf16, #tpu.memory_space<vmem>>, vector<1x64x24xbf16>
    %136 = vector.shape_cast %135 : vector<1x64x24xbf16> to vector<64x24xbf16>
    %cst_136 = arith.constant dense<0.000000e+00> : vector<8x24xf32>
    %137 = tpu.matmul %134, %136, %cst_136 {dimension_numbers = #tpu.dot_dimension_numbers<[1], [0], [0], [1], [0, 0, 1, 1], [], []>} : vector<8x64xbf16>, vector<64x24xbf16>, vector<8x24xf32> -> vector<8x24xf32>
    %138 = arith.addf %132, %137 : vector<8x24xf32>
    %c3 = arith.constant 3 : index
    %c0_137 = arith.constant 0 : index
    %139 = vector.load %arg19[%c3, %c0_137] : memref<12x64xf32, #tpu.memory_space<vmem>>, vector<8x64xf32>
    %140 = arith.truncf %139 : vector<8x64xf32> to vector<8x64xbf16>
    %c3_138 = arith.constant 3 : index
    %c0_139 = arith.constant 0 : index
    %c0_140 = arith.constant 0 : index
    %141 = vector.load %arg12[%c3_138, %c0_139, %c0_140] : memref<5x64x24xbf16, #tpu.memory_space<vmem>>, vector<1x64x24xbf16>
    %142 = vector.shape_cast %141 : vector<1x64x24xbf16> to vector<64x24xbf16>
    %cst_141 = arith.constant dense<0.000000e+00> : vector<8x24xf32>
    %143 = tpu.matmul %140, %142, %cst_141 {dimension_numbers = #tpu.dot_dimension_numbers<[1], [0], [0], [1], [0, 0, 1, 1], [], []>} : vector<8x64xbf16>, vector<64x24xbf16>, vector<8x24xf32> -> vector<8x24xf32>
    %144 = arith.addf %138, %143 : vector<8x24xf32>
    %c4 = arith.constant 4 : index
    %c0_142 = arith.constant 0 : index
    %145 = vector.load %arg19[%c4, %c0_142] : memref<12x64xf32, #tpu.memory_space<vmem>>, vector<8x64xf32>
    %146 = arith.truncf %145 : vector<8x64xf32> to vector<8x64xbf16>
    %c4_143 = arith.constant 4 : index
    %c0_144 = arith.constant 0 : index
    %c0_145 = arith.constant 0 : index
    %147 = vector.load %arg12[%c4_143, %c0_144, %c0_145] : memref<5x64x24xbf16, #tpu.memory_space<vmem>>, vector<1x64x24xbf16>
    %148 = vector.shape_cast %147 : vector<1x64x24xbf16> to vector<64x24xbf16>
    %cst_146 = arith.constant dense<0.000000e+00> : vector<8x24xf32>
    %149 = tpu.matmul %146, %148, %cst_146 {dimension_numbers = #tpu.dot_dimension_numbers<[1], [0], [0], [1], [0, 0, 1, 1], [], []>} : vector<8x64xbf16>, vector<64x24xbf16>, vector<8x24xf32> -> vector<8x24xf32>
    %150 = arith.addf %144, %149 : vector<8x24xf32>
    %c0_147 = arith.constant 0 : index
    %c0_148 = arith.constant 0 : index
    %151 = vector.load %arg13[%c0_147, %c0_148] : memref<1x24xf32, #tpu.memory_space<vmem>>, vector<1x24xf32>
    %152 = vector.broadcast %151 : vector<1x24xf32> to vector<8x24xf32>
    %153 = arith.addf %150, %152 : vector<8x24xf32>
    %154 = math.tanh %153 : vector<8x24xf32>
    %c0_149 = arith.constant 0 : index
    %c0_150 = arith.constant 0 : index
    %c0_151 = arith.constant 0 : index
    %155 = vector.load %arg14[%c0_149, %c0_150, %c0_151] : memref<1x8x24xf32, #tpu.memory_space<vmem>>, vector<1x8x24xf32>
    %156 = vector.shape_cast %155 : vector<1x8x24xf32> to vector<8x24xf32>
    %157 = vector.shape_cast %154 : vector<8x24xf32> to vector<1x8x24xf32>
    tpu.vector_store %arg14[%c0_149, %c0_150, %c0_151], %157 {strides = array<i32>} : memref<1x8x24xf32, #tpu.memory_space<vmem>>, vector<1x8x24xf32>,
    return
  }
  func.func @transform_0(%arg0: i32) -> (i32, i32, i32) {
    %c0_i32 = arith.constant 0 : i32
    %c0_i32_0 = arith.constant 0 : i32
    %c0_i32_1 = arith.constant 0 : i32
    return %arg0, %c0_i32, %c0_i32_0 : i32, i32, i32
  }
  func.func @transform_1(%arg0: i32) -> (i32, i32, i32) {
    %c0_i32 = arith.constant 0 : i32
    %c0_i32_0 = arith.constant 0 : i32
    %c0_i32_1 = arith.constant 0 : i32
    %c0_i32_2 = arith.constant 0 : i32
    return %c0_i32, %c0_i32_0, %c0_i32_1 : i32, i32, i32
  }
  func.func @transform_2(%arg0: i32) -> (i32, i32) {
    %c0_i32 = arith.constant 0 : i32
    %c0_i32_0 = arith.constant 0 : i32
    %c0_i32_1 = arith.constant 0 : i32
    return %c0_i32, %c0_i32_0 : i32, i32
  }
  func.func @transform_3(%arg0: i32) -> (i32, i32) {
    %c0_i32 = arith.constant 0 : i32
    %c0_i32_0 = arith.constant 0 : i32
    %c0_i32_1 = arith.constant 0 : i32
    return %c0_i32, %c0_i32_0 : i32, i32
  }
  func.func @transform_4(%arg0: i32) -> (i32, i32) {
    %c0_i32 = arith.constant 0 : i32
    %c0_i32_0 = arith.constant 0 : i32
    %c0_i32_1 = arith.constant 0 : i32
    return %c0_i32, %c0_i32_0 : i32, i32
  }
  func.func @transform_5(%arg0: i32) -> (i32, i32, i32) {
    %c0_i32 = arith.constant 0 : i32
    %c0_i32_0 = arith.constant 0 : i32
    %c0_i32_1 = arith.constant 0 : i32
    %c0_i32_2 = arith.constant 0 : i32
    return %c0_i32, %c0_i32_0, %c0_i32_1 : i32, i32, i32
  }
  func.func @transform_6(%arg0: i32) -> (i32, i32) {
    %c0_i32 = arith.constant 0 : i32
    %c0_i32_0 = arith.constant 0 : i32
    %c0_i32_1 = arith.constant 0 : i32
    return %c0_i32, %c0_i32_0 : i32, i32
  }
  func.func @transform_7(%arg0: i32) -> (i32, i32, i32) {
    %c0_i32 = arith.constant 0 : i32
    %c0_i32_0 = arith.constant 0 : i32
    %c0_i32_1 = arith.constant 0 : i32
    %c0_i32_2 = arith.constant 0 : i32
    return %c0_i32, %c0_i32_0, %c0_i32_1 : i32, i32, i32
  }
  func.func @transform_8(%arg0: i32) -> (i32, i32) {
    %c0_i32 = arith.constant 0 : i32
    %c0_i32_0 = arith.constant 0 : i32
    %c0_i32_1 = arith.constant 0 : i32
    return %c0_i32, %c0_i32_0 : i32, i32
  }
  func.func @transform_9(%arg0: i32) -> (i32, i32, i32) {
    %c0_i32 = arith.constant 0 : i32
    %c0_i32_0 = arith.constant 0 : i32
    %c0_i32_1 = arith.constant 0 : i32
    %c0_i32_2 = arith.constant 0 : i32
    return %c0_i32, %c0_i32_0, %c0_i32_1 : i32, i32, i32
  }
  func.func @transform_10(%arg0: i32) -> (i32, i32) {
    %c0_i32 = arith.constant 0 : i32
    %c0_i32_0 = arith.constant 0 : i32
    %c0_i32_1 = arith.constant 0 : i32
    return %c0_i32, %c0_i32_0 : i32, i32
  }
  func.func @transform_11(%arg0: i32) -> (i32, i32, i32) {
    %c0_i32 = arith.constant 0 : i32
    %c0_i32_0 = arith.constant 0 : i32
    %c0_i32_1 = arith.constant 0 : i32
    %c0_i32_2 = arith.constant 0 : i32
    return %c0_i32, %c0_i32_0, %c0_i32_1 : i32, i32, i32
  }
  func.func @transform_12(%arg0: i32) -> (i32, i32) {
    %c0_i32 = arith.constant 0 : i32
    %c0_i32_0 = arith.constant 0 : i32
    %c0_i32_1 = arith.constant 0 : i32
    return %c0_i32, %c0_i32_0 : i32, i32
  }
  func.func @transform_13(%arg0: i32) -> (i32, i32, i32) {
    %c0_i32 = arith.constant 0 : i32
    %c0_i32_0 = arith.constant 0 : i32
    %c0_i32_1 = arith.constant 0 : i32
    return %arg0, %c0_i32, %c0_i32_0 : i32, i32, i32
  }
}

</mosaic_0001>

<llo_original>
// kernel: tpu_custom_call.1
$region0: #{tpu_custom_call.1}
  #allocation0 [shape = 'u32[]', space=smem, size = 0x4, offset = 0x4, fixed_abs, tag = 'smem constant byte address 0x4 - core index']
  #allocation1 [shape = 'u32[72,128]{1,0:T(1,128)}', space=vmem, size = 0x9000, scoped, tag = 'internal scratch']
  #allocation2 [shape = 'f32[6,32]{1,0:T(8,128)}', space=vmem, size = 0x1000, scoped, tag = 'scratch operand']
  #allocation3 [shape = 'f32[10,128]{1,0:T(8,128)}', space=vmem, size = 0x2000, scoped, tag = 'scratch operand']
  #allocation4 [shape = 'f32[10,64]{1,0:T(8,128)}', space=vmem, size = 0x2000, scoped, tag = 'scratch operand']
  #allocation5 [shape = 'f32[10,64]{1,0:T(8,128)}', space=vmem, size = 0x2000, scoped, tag = 'scratch operand']
  #allocation6 [shape = 'f32[12,64]{1,0:T(8,128)}', space=vmem, size = 0x2000, scoped, tag = 'scratch operand']
  %s0 = inlined_call_operand.vmem [shape: f32[2,4,32], index: 0, kind: input, shape index: {}]
  %s1 = inlined_call_operand.vmem [shape: bf16[3,32,64], index: 1, kind: input, shape index: {}]
  %s2 = inlined_call_operand.vmem [shape: f32[1,64], index: 2, kind: input, shape index: {}]
  %s3 = inlined_call_operand.vmem [shape: bf16[64,128], index: 3, kind: input, shape index: {}]
  %s4 = inlined_call_operand.vmem [shape: bf16[8,4], index: 4, kind: input, shape index: {}]
  %s5 = inlined_call_operand.vmem [shape: bf16[3,128,64], index: 5, kind: input, shape index: {}]
  %s6 = inlined_call_operand.vmem [shape: f32[1,64], index: 6, kind: input, shape index: {}]
  %s7 = inlined_call_operand.vmem [shape: bf16[3,64,64], index: 7, kind: input, shape index: {}]
  %s8 = inlined_call_operand.vmem [shape: f32[1,64], index: 8, kind: input, shape index: {}]
  %s9 = inlined_call_operand.vmem [shape: bf16[3,64,64], index: 9, kind: input, shape index: {}]
  %s10 = inlined_call_operand.vmem [shape: f32[1,64], index: 10, kind: input, shape index: {}]
  %s11 = inlined_call_operand.vmem [shape: bf16[5,64,24], index: 11, kind: input, shape index: {}]
  %s12 = inlined_call_operand.vmem [shape: f32[1,24], index: 12, kind: input, shape index: {}]
  %s13 = inlined_call_operand.hbm [shape: f32[2,8,24], index: 13, kind: output, shape index: {}]
  %s14 = sld [smem:[#allocation0]]
  $region85: #{tpu_custom_call.1} parent=0
    _
  %s16 = ssub.s32 1, %s14
  %s17 = scalar_select 0, %s16, %s14
  $region1: #{tpu_custom_call.1} parent=0
    #allocation7 [shape = 'u8[8192]{0}', space=vmem, size = 0x2000, scoped, tag = 'output window, operand 0']
    #allocation8 [shape = 's32[2]{0}', space=sflag, size = 0x8, scoped, tag = 'scoped memory for tpu_custom_call.1']
    %18 = vsyncpa [#allocation8], 0
    %s19 = scalar_lea.sflag [#allocation8], 1
    %20 = vsyncpa %s19, 0
    loop: start=0, step=1, limit=4
    $region2: #{tpu_custom_call.1} parent=1 // loop_pre_header
      _
    $region3: #{tpu_custom_call.1} parent=1 // loop_header
      %s22 = sphi 0, %s26
      %p23 = scmp.ge.s32.totalorder %s22, 4
      %s32 = sphi 0, %s34
      %s35 = sphi 0, %s32
      %s36 = sphi 0, %s35
      %s52 = sphi 0, %s36
      %s56 = sphi 0, %s56
      %s58 = sphi 0, %s56
      %s59 = sphi 0, %s58
      %s73 = sphi 0, %s59
      %s77 = sphi 0, %s77
      %s79 = sphi 0, %s77
      %s80 = sphi 0, %s79
      %s94 = sphi 0, %s80
      %s98 = sphi 0, %s98
      %s100 = sphi 0, %s98
      %s101 = sphi 0, %s100
      %s115 = sphi 0, %s101
      %s119 = sphi 0, %s119
      %s121 = sphi 0, %s119
      %s122 = sphi 0, %s121
      %s136 = sphi 0, %s122
      %s140 = sphi 0, %s140
      %s142 = sphi 0, %s140
      %s143 = sphi 0, %s142
      %s157 = sphi 0, %s143
      %s161 = sphi 0, %s161
      %s163 = sphi 0, %s161
      %s164 = sphi 0, %s163
      %s178 = sphi 0, %s164
      %s182 = sphi 0, %s182
      %s184 = sphi 0, %s182
      %s185 = sphi 0, %s184
      %s199 = sphi 0, %s185
      %s203 = sphi 0, %s203
      %s205 = sphi 0, %s203
      %s206 = sphi 0, %s205
      %s220 = sphi 0, %s206
      %s224 = sphi 0, %s224
      %s226 = sphi 0, %s224
      %s227 = sphi 0, %s226
      %s241 = sphi 0, %s227
      %s245 = sphi 0, %s245
      %s247 = sphi 0, %s245
      %s248 = sphi 0, %s247
      %s262 = sphi 0, %s248
      %s266 = sphi 0, %s266
      %s268 = sphi 0, %s266
      %s269 = sphi 0, %s268
      %s283 = sphi 0, %s269
      %s287 = sphi 0, %s287
      %s289 = sphi 0, %s287
      %s290 = sphi 0, %s289
      %s304 = sphi 0, %s290
      %s310 = sphi 0, %s312
      %s313 = sphi 0, %s310
      %s314 = sphi 0, %s313
      %s330 = sphi 0, %s314
    $region4: #{tpu_custom_call.1} parent=1 // loop_header_branch
      %25 = sbr.rel (%p23) target = $region8
    $region5: #{tpu_custom_call.1} parent=1 // loop_body
      %s27 = ssub.s32 %s22, 1
      %s28 = ssub.s32 %s22, 2
      %s29 = sadd.s32 %s22, 1
      %s30 = ssub.s32 %s22, %s29
      %p31 = scmp.eq.s32.totalorder %s30, 0
      %s33 = sadd.s32 %s32, 1
      %s34 = scalar_select %p31, %s32, %s33
      %p37 = pneg %p31
      %p38 = scmp.eq.s32.totalorder %s22, 1
      %p39 = por %p37, %p38
      %p40 = scmp.ne.s32.totalorder %s32, %s35
      %p41 = scmp.eq.s32.totalorder %s22, 0
      %p42 = por %p40, %p41
      %p43 = scmp.ne.s32.totalorder %s32, %s35
      %p44 = scmp.eq.s32.totalorder %s27, 1
      %p45 = por %p43, %p44
      %p46 = scmp.ne.s32.totalorder %s35, %s36
      %p47 = scmp.eq.s32.totalorder %s27, 0
      %p48 = por %p46, %p47
      %p49 = scmp.ne.s32.totalorder %s35, %s36
      %p50 = scmp.eq.s32.totalorder %s28, 1
      %p51 = por %p49, %p50
      %p53 = scmp.ne.s32.totalorder %s36, %s52
      %p54 = scmp.eq.s32.totalorder %s28, 0
      %p55 = por %p53, %p54
      %s57 = sadd.s32 %s56, 1
      %p60 = scmp.eq.s32.totalorder %s22, 1
      %p61 = scmp.ne.s32.totalorder %s56, %s58
      %p62 = scmp.eq.s32.totalorder %s22, 0
      %p63 = por %p61, %p62
      %p64 = scmp.ne.s32.totalorder %s56, %s58
      %p65 = scmp.eq.s32.totalorder %s27, 1
      %p66 = por %p64, %p65
      %p67 = scmp.ne.s32.totalorder %s58, %s59
      %p68 = scmp.eq.s32.totalorder %s27, 0
      %p69 = por %p67, %p68
      %p70 = scmp.ne.s32.totalorder %s58, %s59
      %p71 = scmp.eq.s32.totalorder %s28, 1
      %p72 = por %p70, %p71
      %p74 = scmp.ne.s32.totalorder %s59, %s73
      %p75 = scmp.eq.s32.totalorder %s28, 0
      %p76 = por %p74, %p75
      %s78 = sadd.s32 %s77, 1
      %p81 = scmp.eq.s32.totalorder %s22, 1
      %p82 = scmp.ne.s32.totalorder %s77, %s79
      %p83 = scmp.eq.s32.totalorder %s22, 0
      %p84 = por %p82, %p83
      %p85 = scmp.ne.s32.totalorder %s77, %s79
      %p86 = scmp.eq.s32.totalorder %s27, 1
      %p87 = por %p85, %p86
      %p88 = scmp.ne.s32.totalorder %s79, %s80
      %p89 = scmp.eq.s32.totalorder %s27, 0
      %p90 = por %p88, %p89
      %p91 = scmp.ne.s32.totalorder %s79, %s80
      %p92 = scmp.eq.s32.totalorder %s28, 1
      %p93 = por %p91, %p92
      %p95 = scmp.ne.s32.totalorder %s80, %s94
      %p96 = scmp.eq.s32.totalorder %s28, 0
      %p97 = por %p95, %p96
      %s99 = sadd.s32 %s98, 1
      %p102 = scmp.eq.s32.totalorder %s22, 1
      %p103 = scmp.ne.s32.totalorder %s98, %s100
      %p104 = scmp.eq.s32.totalorder %s22, 0
      %p105 = por %p103, %p104
      %p106 = scmp.ne.s32.totalorder %s98, %s100
      %p107 = scmp.eq.s32.totalorder %s27, 1
      %p108 = por %p106, %p107
      %p109 = scmp.ne.s32.totalorder %s100, %s101
      %p110 = scmp.eq.s32.totalorder %s27, 0
      %p111 = por %p109, %p110
      %p112 = scmp.ne.s32.totalorder %s100, %s101
      %p113 = scmp.eq.s32.totalorder %s28, 1
      %p114 = por %p112, %p113
      %p116 = scmp.ne.s32.totalorder %s101, %s115
      %p117 = scmp.eq.s32.totalorder %s28, 0
      %p118 = por %p116, %p117
      %s120 = sadd.s32 %s119, 1
      %p123 = scmp.eq.s32.totalorder %s22, 1
      %p124 = scmp.ne.s32.totalorder %s119, %s121
      %p125 = scmp.eq.s32.totalorder %s22, 0
      %p126 = por %p124, %p125
      %p127 = scmp.ne.s32.totalorder %s119, %s121
      %p128 = scmp.eq.s32.totalorder %s27, 1
      %p129 = por %p127, %p128
      %p130 = scmp.ne.s32.totalorder %s121, %s122
      %p131 = scmp.eq.s32.totalorder %s27, 0
      %p132 = por %p130, %p131
      %p133 = scmp.ne.s32.totalorder %s121, %s122
      %p134 = scmp.eq.s32.totalorder %s28, 1
      %p135 = por %p133, %p134
      %p137 = scmp.ne.s32.totalorder %s122, %s136
      %p138 = scmp.eq.s32.totalorder %s28, 0
      %p139 = por %p137, %p138
      %s141 = sadd.s32 %s140, 1
      %p144 = scmp.eq.s32.totalorder %s22, 1
      %p145 = scmp.ne.s32.totalorder %s140, %s142
      %p146 = scmp.eq.s32.totalorder %s22, 0
      %p147 = por %p145, %p146
      %p148 = scmp.ne.s32.totalorder %s140, %s142
      %p149 = scmp.eq.s32.totalorder %s27, 1
      %p150 = por %p148, %p149
      %p151 = scmp.ne.s32.totalorder %s142, %s143
      %p152 = scmp.eq.s32.totalorder %s27, 0
      %p153 = por %p151, %p152
      %p154 = scmp.ne.s32.totalorder %s142, %s143
      %p155 = scmp.eq.s32.totalorder %s28, 1
      %p156 = por %p154, %p155
      %p158 = scmp.ne.s32.totalorder %s143, %s157
      %p159 = scmp.eq.s32.totalorder %s28, 0
      %p160 = por %p158, %p159
      %s162 = sadd.s32 %s161, 1
      %p165 = scmp.eq.s32.totalorder %s22, 1
      %p166 = scmp.ne.s32.totalorder %s161, %s163
      %p167 = scmp.eq.s32.totalorder %s22, 0
      %p168 = por %p166, %p167
      %p169 = scmp.ne.s32.totalorder %s161, %s163
      %p170 = scmp.eq.s32.totalorder %s27, 1
      %p171 = por %p169, %p170
      %p172 = scmp.ne.s32.totalorder %s163, %s164
      %p173 = scmp.eq.s32.totalorder %s27, 0
      %p174 = por %p172, %p173
      %p175 = scmp.ne.s32.totalorder %s163, %s164
      %p176 = scmp.eq.s32.totalorder %s28, 1
      %p177 = por %p175, %p176
      %p179 = scmp.ne.s32.totalorder %s164, %s178
      %p180 = scmp.eq.s32.totalorder %s28, 0
      %p181 = por %p179, %p180
      %s183 = sadd.s32 %s182, 1
      %p186 = scmp.eq.s32.totalorder %s22, 1
      %p187 = scmp.ne.s32.totalorder %s182, %s184
      %p188 = scmp.eq.s32.totalorder %s22, 0
      %p189 = por %p187, %p188
      %p190 = scmp.ne.s32.totalorder %s182, %s184
      %p191 = scmp.eq.s32.totalorder %s27, 1
      %p192 = por %p190, %p191
      %p193 = scmp.ne.s32.totalorder %s184, %s185
      %p194 = scmp.eq.s32.totalorder %s27, 0
      %p195 = por %p193, %p194
      %p196 = scmp.ne.s32.totalorder %s184, %s185
      %p197 = scmp.eq.s32.totalorder %s28, 1
      %p198 = por %p196, %p197
      %p200 = scmp.ne.s32.totalorder %s185, %s199
      %p201 = scmp.eq.s32.totalorder %s28, 0
      %p202 = por %p200, %p201
      %s204 = sadd.s32 %s203, 1
      %p207 = scmp.eq.s32.totalorder %s22, 1
      %p208 = scmp.ne.s32.totalorder %s203, %s205
      %p209 = scmp.eq.s32.totalorder %s22, 0
      %p210 = por %p208, %p209
      %p211 = scmp.ne.s32.totalorder %s203, %s205
      %p212 = scmp.eq.s32.totalorder %s27, 1
      %p213 = por %p211, %p212
      %p214 = scmp.ne.s32.totalorder %s205, %s206
      %p215 = scmp.eq.s32.totalorder %s27, 0
      %p216 = por %p214, %p215
      %p217 = scmp.ne.s32.totalorder %s205, %s206
      %p218 = scmp.eq.s32.totalorder %s28, 1
      %p219 = por %p217, %p218
      %p221 = scmp.ne.s32.totalorder %s206, %s220
      %p222 = scmp.eq.s32.totalorder %s28, 0
      %p223 = por %p221, %p222
      %s225 = sadd.s32 %s224, 1
      %p228 = scmp.eq.s32.totalorder %s22, 1
      %p229 = scmp.ne.s32.totalorder %s224, %s226
      %p230 = scmp.eq.s32.totalorder %s22, 0
      %p231 = por %p229, %p230
      %p232 = scmp.ne.s32.totalorder %s224, %s226
      %p233 = scmp.eq.s32.totalorder %s27, 1
      %p234 = por %p232, %p233
      %p235 = scmp.ne.s32.totalorder %s226, %s227
      %p236 = scmp.eq.s32.totalorder %s27, 0
      %p237 = por %p235, %p236
      %p238 = scmp.ne.s32.totalorder %s226, %s227
      %p239 = scmp.eq.s32.totalorder %s28, 1
      %p240 = por %p238, %p239
      %p242 = scmp.ne.s32.totalorder %s227, %s241
      %p243 = scmp.eq.s32.totalorder %s28, 0
      %p244 = por %p242, %p243
      %s246 = sadd.s32 %s245, 1
      %p249 = scmp.eq.s32.totalorder %s22, 1
      %p250 = scmp.ne.s32.totalorder %s245, %s247
      %p251 = scmp.eq.s32.totalorder %s22, 0
      %p252 = por %p250, %p251
      %p253 = scmp.ne.s32.totalorder %s245, %s247
      %p254 = scmp.eq.s32.totalorder %s27, 1
      %p255 = por %p253, %p254
      %p256 = scmp.ne.s32.totalorder %s247, %s248
      %p257 = scmp.eq.s32.totalorder %s27, 0
      %p258 = por %p256, %p257
      %p259 = scmp.ne.s32.totalorder %s247, %s248
      %p260 = scmp.eq.s32.totalorder %s28, 1
      %p261 = por %p259, %p260
      %p263 = scmp.ne.s32.totalorder %s248, %s262
      %p264 = scmp.eq.s32.totalorder %s28, 0
      %p265 = por %p263, %p264
      %s267 = sadd.s32 %s266, 1
      %p270 = scmp.eq.s32.totalorder %s22, 1
      %p271 = scmp.ne.s32.totalorder %s266, %s268
      %p272 = scmp.eq.s32.totalorder %s22, 0
      %p273 = por %p271, %p272
      %p274 = scmp.ne.s32.totalorder %s266, %s268
      %p275 = scmp.eq.s32.totalorder %s27, 1
      %p276 = por %p274, %p275
      %p277 = scmp.ne.s32.totalorder %s268, %s269
      %p278 = scmp.eq.s32.totalorder %s27, 0
      %p279 = por %p277, %p278
      %p280 = scmp.ne.s32.totalorder %s268, %s269
      %p281 = scmp.eq.s32.totalorder %s28, 1
      %p282 = por %p280, %p281
      %p284 = scmp.ne.s32.totalorder %s269, %s283
      %p285 = scmp.eq.s32.totalorder %s28, 0
      %p286 = por %p284, %p285
      %s288 = sadd.s32 %s287, 1
      %p291 = scmp.eq.s32.totalorder %s22, 1
      %p292 = scmp.ne.s32.totalorder %s287, %s289
      %p293 = scmp.eq.s32.totalorder %s22, 0
      %p294 = por %p292, %p293
      %p295 = scmp.ne.s32.totalorder %s287, %s289
      %p296 = scmp.eq.s32.totalorder %s27, 1
      %p297 = por %p295, %p296
      %p298 = scmp.ne.s32.totalorder %s289, %s290
      %p299 = scmp.eq.s32.totalorder %s27, 0
      %p300 = por %p298, %p299
      %p301 = scmp.ne.s32.totalorder %s289, %s290
      %p302 = scmp.eq.s32.totalorder %s28, 1
      %p303 = por %p301, %p302
      %p305 = scmp.ne.s32.totalorder %s290, %s304
      %p306 = scmp.eq.s32.totalorder %s28, 0
      %p307 = por %p305, %p306
      %s308 = ssub.s32 %s22, %s29
      %p309 = scmp.eq.s32.totalorder %s308, 0
      %s311 = sadd.s32 %s310, 1
      %s312 = scalar_select %p309, %s310, %s311
      %p315 = pneg %p309
      %p316 = scmp.eq.s32.totalorder %s22, 1
      %p317 = por %p315, %p316
      %p318 = scmp.ne.s32.totalorder %s310, %s313
      %p319 = scmp.eq.s32.totalorder %s22, 0
      %p320 = por %p318, %p319
      %p321 = scmp.ne.s32.totalorder %s310, %s313
      %p322 = scmp.eq.s32.totalorder %s27, 1
      %p323 = por %p321, %p322
      %p324 = scmp.ne.s32.totalorder %s313, %s314
      %p325 = scmp.eq.s32.totalorder %s27, 0
      %p326 = por %p324, %p325
      %p327 = scmp.ne.s32.totalorder %s313, %s314
      %p328 = scmp.eq.s32.totalorder %s28, 1
      %p329 = por %p327, %p328
      %p331 = scmp.ne.s32.totalorder %s314, %s330
      %p332 = scmp.eq.s32.totalorder %s28, 0
      %p333 = por %p331, %p332
      %p334 = scmp.le.s32.totalorder 1, %s22
      %p335 = scmp.lt.s32.totalorder %s22, 3
      %p336 = pnand %p334, %p335
      %p337 = pneg %p336
      // Predicated region
      $region9: #{tpu_custom_call.1} parent=5 // pred_check
        _
      $region10: #{tpu_custom_call.1} parent=5 // pred_check_branch
        %339 = sbr.rel (%p336) target = $region12
      $region11: #{tpu_custom_call.1} parent=5 // pred_region
        %s340 = ssub.s32 %s22, 1
        // Predicated region
        $region13: #{tpu_custom_call.1} parent=11 // pred_check
          %p341 = pneg %p69
        $region14: #{tpu_custom_call.1} parent=11 // pred_check_branch
          %343 = sbr.rel (%p341) target = $region16
        $region15: #{tpu_custom_call.1} parent=11 // pred_region
          _
        $region16: #{tpu_custom_call.1} parent=11 // pred_fallthru
          _
        // Predicated region
        $region17: #{tpu_custom_call.1} parent=11 // pred_check
          %p344 = pneg %p90
        $region18: #{tpu_custom_call.1} parent=11 // pred_check_branch
          %346 = sbr.rel (%p344) target = $region20
        $region19: #{tpu_custom_call.1} parent=11 // pred_region
          _
        $region20: #{tpu_custom_call.1} parent=11 // pred_fallthru
          _
        // Predicated region
        $region21: #{tpu_custom_call.1} parent=11 // pred_check
          %p347 = pneg %p111
        $region22: #{tpu_custom_call.1} parent=11 // pred_check_branch
          %349 = sbr.rel (%p347) target = $region24
        $region23: #{tpu_custom_call.1} parent=11 // pred_region
          _
        $region24: #{tpu_custom_call.1} parent=11 // pred_fallthru
          _
        // Predicated region
        $region25: #{tpu_custom_call.1} parent=11 // pred_check
          %p350 = pneg %p132
        $region26: #{tpu_custom_call.1} parent=11 // pred_check_branch
          %352 = sbr.rel (%p350) target = $region28
        $region27: #{tpu_custom_call.1} parent=11 // pred_region
          _
        $region28: #{tpu_custom_call.1} parent=11 // pred_fallthru
          _
        // Predicated region
        $region29: #{tpu_custom_call.1} parent=11 // pred_check
          %p353 = pneg %p153
        $region30: #{tpu_custom_call.1} parent=11 // pred_check_branch
          %355 = sbr.rel (%p353) target = $region32
        $region31: #{tpu_custom_call.1} parent=11 // pred_region
          _
        $region32: #{tpu_custom_call.1} parent=11 // pred_fallthru
          _
        // Predicated region
        $region33: #{tpu_custom_call.1} parent=11 // pred_check
          %p356 = pneg %p174
        $region34: #{tpu_custom_call.1} parent=11 // pred_check_branch
          %358 = sbr.rel (%p356) target = $region36
        $region35: #{tpu_custom_call.1} parent=11 // pred_region
          _
        $region36: #{tpu_custom_call.1} parent=11 // pred_fallthru
          _
        // Predicated region
        $region37: #{tpu_custom_call.1} parent=11 // pred_check
          %p359 = pneg %p195
        $region38: #{tpu_custom_call.1} parent=11 // pred_check_branch
          %361 = sbr.rel (%p359) target = $region40
        $region39: #{tpu_custom_call.1} parent=11 // pred_region
          _
        $region40: #{tpu_custom_call.1} parent=11 // pred_fallthru
          _
        // Predicated region
        $region41: #{tpu_custom_call.1} parent=11 // pred_check
          %p362 = pneg %p216
        $region42: #{tpu_custom_call.1} parent=11 // pred_check_branch
          %364 = sbr.rel (%p362) target = $region44
        $region43: #{tpu_custom_call.1} parent=11 // pred_region
          _
        $region44: #{tpu_custom_call.1} parent=11 // pred_fallthru
          _
        // Predicated region
        $region45: #{tpu_custom_call.1} parent=11 // pred_check
          %p365 = pneg %p237
        $region46: #{tpu_custom_call.1} parent=11 // pred_check_branch
          %367 = sbr.rel (%p365) target = $region48
        $region47: #{tpu_custom_call.1} parent=11 // pred_region
          _
        $region48: #{tpu_custom_call.1} parent=11 // pred_fallthru
          _
        // Predicated region
        $region49: #{tpu_custom_call.1} parent=11 // pred_check
          %p368 = pneg %p258
        $region50: #{tpu_custom_call.1} parent=11 // pred_check_branch
          %370 = sbr.rel (%p368) target = $region52
        $region51: #{tpu_custom_call.1} parent=11 // pred_region
          _
        $region52: #{tpu_custom_call.1} parent=11 // pred_fallthru
          _
        // Predicated region
        $region53: #{tpu_custom_call.1} parent=11 // pred_check
          %p371 = pneg %p279
        $region54: #{tpu_custom_call.1} parent=11 // pred_check_branch
          %373 = sbr.rel (%p371) target = $region56
        $region55: #{tpu_custom_call.1} parent=11 // pred_region
          _
        $region56: #{tpu_custom_call.1} parent=11 // pred_fallthru
          _
        // Predicated region
        $region57: #{tpu_custom_call.1} parent=11 // pred_check
          %p374 = pneg %p300
        $region58: #{tpu_custom_call.1} parent=11 // pred_check_branch
          %376 = sbr.rel (%p374) target = $region60
        $region59: #{tpu_custom_call.1} parent=11 // pred_region
          _
        $region60: #{tpu_custom_call.1} parent=11 // pred_fallthru
          _
      $region12: #{tpu_custom_call.1} parent=5 // pred_fallthru
        _
      %p377 = scmp.lt.s32.totalorder %s22, 2
      // Predicated region
      $region61: #{tpu_custom_call.1} parent=5 // pred_check
        %p378 = pneg %p377
      $region62: #{tpu_custom_call.1} parent=5 // pred_check_branch
        %380 = sbr.rel (%p378) target = $region64
      $region63: #{tpu_custom_call.1} parent=5 // pred_region
        // Predicated region
        $region65: #{tpu_custom_call.1} parent=63 // pred_check
          %p381 = pneg %p42
        $region66: #{tpu_custom_call.1} parent=63 // pred_check_branch
          %383 = sbr.rel (%p381) target = $region68
        $region67: #{tpu_custom_call.1} parent=63 // pred_region
          %p384 = scmp.lt.s32.totalorder %s22, 1
          %s385 = scalar_select %p384, %s22, 1
          %s386 = smul.addr %s385, 4
          %s387 = scalar_lea.vmem %s0, %s386
        $region68: #{tpu_custom_call.1} parent=63 // pred_fallthru
          _
      $region64: #{tpu_custom_call.1} parent=5 // pred_fallthru
        _
      %p388 = scmp.le.s32.totalorder 1, %s22
      %p389 = scmp.lt.s32.totalorder %s22, 3
      %p390 = pnand %p388, %p389
      %p391 = pneg %p390
      // Predicated region
      $region69: #{tpu_custom_call.1} parent=5 // pred_check
        _
      $region70: #{tpu_custom_call.1} parent=5 // pred_check_branch
        %393 = sbr.rel (%p390) target = $region72
      $region71: #{tpu_custom_call.1} parent=5 // pred_region
        %s394 = ssub.s32 %s22, 1
        %p395 = scmp.lt.s32.totalorder %s27, 1
        %s396 = scalar_select %p395, %s27, 1
        %s397 = smul.addr %s396, 4
        %s398 = scalar_lea.vmem %s0, %s397
        %p399 = pneg %p48
        %p400 = pneg %p45
        %p401 = pneg %p69
        %p402 = pneg %p66
        %p403 = pneg %p90
        %p404 = pneg %p87
        %p405 = pneg %p111
        %p406 = pneg %p108
        %p407 = pneg %p132
        %p408 = pneg %p129
        %p409 = pneg %p153
        %p410 = pneg %p150
        %p411 = pneg %p174
        %p412 = pneg %p171
        %p413 = pneg %p195
        %p414 = pneg %p192
        %p415 = pneg %p216
        %p416 = pneg %p213
        %p417 = pneg %p237
        %p418 = pneg %p234
        %p419 = pneg %p258
        %p420 = pneg %p255
        %p421 = pneg %p279
        %p422 = pneg %p276
        %p423 = pneg %p300
        %p424 = pneg %p297
        %p425 = pneg %p326
        %p426 = pneg %p323
        %s427 = sand.u32 %s313, 1
        %s428 = scalar_lea.sflag [#allocation8], %s427
        %s429 = sand.u32 %s313, 1
        %s430 = smul.addr %s429, 8
        %s431 = scalar_lea.vmem [#allocation7], %s430
        %p432 = scmp.lt.s32.totalorder %s27, 1
        %s433 = scalar_select %p432, %s27, 1
        %s434 = smul.addr %s433, 4
        %s435 = scalar_lea.vmem %s0, %s434
        %v437 = vld [vmem:[%s435] sm:$0xf]
        %vm438 = vcmask 259072
        %439 = vst.msk [vmem:[#allocation2] sm:$0x3f] %vm438, 0.0
        %vm440 = vcmask 257024
        %441 = vst.msk [vmem:[#allocation2 + $0x1] sm:$0xf] %vm440, %v437
        %v442 = vld [vmem:[#allocation2] sm:$0xf]
        %v443 = vpack.c.bf16 %v442, %v442
        %v444 = vld [vmem:[%s1] sm:$0xf]
        %v445 = vld [vmem:[%s1 + $0x4] sm:$0xf]
        %v446 = vld [vmem:[%s1 + $0x8] sm:$0xf]
        %v447 = vld [vmem:[%s1 + $0xc] sm:$0xf]
        %v448 = vld [vmem:[#allocation2 + $0x1] sm:$0xf]
        %v449 = vpack.c.bf16 %v448, %v448
        %s450 = scalar_lea.vmem %s1, 16
        %v451 = vld [vmem:[%s450] sm:$0xf]
        %v452 = vld [vmem:[%s450 + $0x4] sm:$0xf]
        %v453 = vld [vmem:[%s450 + $0x8] sm:$0xf]
        %v454 = vld [vmem:[%s450 + $0xc] sm:$0xf]
        %v459 = vunpack.c.l.b16 %v451
        %v460 = vunpack.c.l.b16 %v452
        %v461 = vunpack.c.l.b16 %v453
        %v462 = vunpack.c.l.b16 %v454
        %v463 = vpack.c.b16 %v460, %v459
        %v464 = vpack.c.b16 %v462, %v461
        %vm467 = vcmask 261120
        %v469 = vsel %vm467, %v449, 0
        %471 = vmatpush.bf16.msra.mxu0 0
        %472 = vmatpush.bf16.msra.mxu0 0
        %473 = vmatpush.bf16.msra.mxu0 0
        %474 = vmatpush.bf16.msra.mxu0 0
        %475 = vmatpush.bf16.msra.mxu0 0
        %476 = vmatpush.bf16.msra.mxu0 0
        %477 = vmatpush.bf16.msra.mxu0 %v464
        %478 = vmatpush.bf16.msra.mxu0 %v463
        %479 = vmatmul.bf16.gmra.mxu0 %v469
        %v480 = vpop.f32.mrf.mxu0
        %v481 = vadd.f32 0.0, %v480
        %v482 = vpop.f32.mrf.mxu0
        %483 = vdwg.mxu0
        %v488 = vunpack.c.l.b16 %v444
        %v489 = vunpack.c.l.b16 %v445
        %v490 = vunpack.c.l.b16 %v446
        %v491 = vunpack.c.l.b16 %v447
        %v492 = vpack.c.b16 %v489, %v488
        %v493 = vpack.c.b16 %v491, %v490
        %v497 = vsel %vm467, %v443, 0
        %499 = vmatpush.bf16.msra.mxu0 0
        %500 = vmatpush.bf16.msra.mxu0 0
        %501 = vmatpush.bf16.msra.mxu0 0
        %502 = vmatpush.bf16.msra.mxu0 0
        %503 = vmatpush.bf16.msra.mxu0 0
        %504 = vmatpush.bf16.msra.mxu0 0
        %505 = vmatpush.bf16.msra.mxu0 %v493
        %506 = vmatpush.bf16.msra.mxu0 %v492
        %507 = vmatmul.bf16.gmra.mxu0 %v497
        %v508 = vpop.f32.mrf.mxu0
        %v509 = vadd.f32 %v481, %v508
        %v510 = vpop.f32.mrf.mxu0
        %511 = vdwg.mxu0
        %v512 = vld [vmem:[#allocation2 + $0x2] sm:$0xf]
        %v513 = vpack.c.bf16 %v512, %v512
        %s514 = scalar_lea.vmem %s1, 32
        %v515 = vld [vmem:[%s514] sm:$0xf]
        %v516 = vld [vmem:[%s514 + $0x4] sm:$0xf]
        %v517 = vld [vmem:[%s514 + $0x8] sm:$0xf]
        %v518 = vld [vmem:[%s514 + $0xc] sm:$0xf]
        %v523 = vunpack.c.l.b16 %v515
        %v524 = vunpack.c.l.b16 %v516
        %v525 = vunpack.c.l.b16 %v517
        %v526 = vunpack.c.l.b16 %v518
        %v527 = vpack.c.b16 %v524, %v523
        %v528 = vpack.c.b16 %v526, %v525
        %v532 = vsel %vm467, %v513, 0
        %534 = vmatpush.bf16.msra.mxu0 0
        %535 = vmatpush.bf16.msra.mxu0 0
        %536 = vmatpush.bf16.msra.mxu0 0
        %537 = vmatpush.bf16.msra.mxu0 0
        %538 = vmatpush.bf16.msra.mxu0 0
        %539 = vmatpush.bf16.msra.mxu0 0
        %540 = vmatpush.bf16.msra.mxu0 %v528
        %541 = vmatpush.bf16.msra.mxu0 %v527
        %542 = vmatmul.bf16.gmra.mxu0 %v532
        %v543 = vpop.f32.mrf.mxu0
        %v544 = vadd.f32 0.0, %v543
        %v545 = vpop.f32.mrf.mxu0
        %546 = vdwg.mxu0
        %v547 = vadd.f32 %v509, %v544
        %v548 = vld [vmem:[%s2] sm:$0x1]
        %v550 = vperm.slane %v548, 0
        %v552 = vadd.f32 %v547, %v550
        %v553 = vmax.f32 %v552, 0.0
        %v554 = vpack.c.bf16 %v553, %v553
        %v555 = vld [vmem:[%s3] sm:$0xf]
        %v556 = vld [vmem:[%s3 + $0x4] sm:$0xf]
        %v557 = vld [vmem:[%s3 + $0x8] sm:$0xf]
        %v558 = vld [vmem:[%s3 + $0xc] sm:$0xf]
        %v559 = vld [vmem:[%s3 + $0x10] sm:$0xf]
        %v560 = vld [vmem:[%s3 + $0x14] sm:$0xf]
        %v561 = vld [vmem:[%s3 + $0x18] sm:$0xf]
        %v562 = vld [vmem:[%s3 + $0x1c] sm:$0xf]
        %v571 = vunpack.c.l.b16 %v555
        %v572 = vunpack.c.l.b16 %v556
        %v573 = vunpack.c.l.b16 %v557
        %v574 = vunpack.c.l.b16 %v558
        %v575 = vunpack.c.l.b16 %v559
        %v576 = vunpack.c.l.b16 %v560
        %v577 = vunpack.c.l.b16 %v561
        %v578 = vunpack.c.l.b16 %v562
        %v579 = vpack.c.b16 %v572, %v571
        %v580 = vpack.c.b16 %v574, %v573
        %v581 = vpack.c.b16 %v576, %v575
        %v582 = vpack.c.b16 %v578, %v577
        %vm587 = vcmask 523264
        %v589 = vsel %vm587, %v554, 0
        %591 = vmatpush.bf16.msra.mxu0 0
        %592 = vmatpush.bf16.msra.mxu0 0
        %593 = vmatpush.bf16.msra.mxu0 0
        %594 = vmatpush.bf16.msra.mxu0 0
        %595 = vmatpush.bf16.msra.mxu0 %v582
        %596 = vmatpush.bf16.msra.mxu0 %v581
        %597 = vmatpush.bf16.msra.mxu0 %v580
        %598 = vmatpush.bf16.msra.mxu0 %v579
        %599 = vmatmul.bf16.gmra.mxu0 %v589
        %v600 = vpop.f32.mrf.mxu0
        %v601 = vadd.f32 0.0, %v600
        %v602 = vpop.f32.mrf.mxu0
        %603 = vdwg.mxu0
        %v604 = vld [vmem:[%s4] sm:$0xf]
        %v605 = vpack.c.bf16 %v601, %v601
        %vm606 = vcmask 31744
        %v608 = vsel %vm606, %v604, 0
        %vm610 = vcmask 1041408
        %v612 = vsel %vm610, %v605, 0
        %614 = vmatpush.bf16.msra.mxu0 0
        %615 = vmatpush.bf16.msra.mxu0 0
        %616 = vmatpush.bf16.msra.mxu0 0
        %617 = vmatpush.bf16.msra.mxu0 0
        %618 = vmatpush.bf16.msra.mxu0 0
        %619 = vmatpush.bf16.msra.mxu0 0
        %620 = vmatpush.bf16.msra.mxu0 0
        %621 = vmatpush.bf16.msra.mxu0 %v612
        %622 = vmatmul.bf16.gmra.mxu0 %v608
        %v623 = vpop.f32.mrf.mxu0
        %v624 = vadd.f32 0.0, %v623
        %v625 = vpop.f32.mrf.mxu0
        %626 = vdwg.mxu0
        %627 = vst [vmem:[#allocation3] sm:$0xff] 0.0
        %628 = vst [vmem:[#allocation3 + $0x8] sm:$0x3] 0.0
        %629 = vst [vmem:[#allocation3 + $0x1] sm:$0xff] %v624
        %v630 = vld [vmem:[#allocation3] sm:$0xff]
        %v631 = vpack.c.bf16 %v630, %v630
        %v632 = vld [vmem:[%s5] sm:$0xf]
        %v633 = vld [vmem:[%s5 + $0x4] sm:$0xf]
        %v634 = vld [vmem:[%s5 + $0x8] sm:$0xf]
        %v635 = vld [vmem:[%s5 + $0xc] sm:$0xf]
        %v636 = vld [vmem:[%s5 + $0x10] sm:$0xf]
        %v637 = vld [vmem:[%s5 + $0x14] sm:$0xf]
        %v638 = vld [vmem:[%s5 + $0x18] sm:$0xf]
        %v639 = vld [vmem:[%s5 + $0x1c] sm:$0xf]
        %v640 = vld [vmem:[%s5 + $0x20] sm:$0xf]
        %v641 = vld [vmem:[%s5 + $0x24] sm:$0xf]
        %v642 = vld [vmem:[%s5 + $0x28] sm:$0xf]
        %v643 = vld [vmem:[%s5 + $0x2c] sm:$0xf]
        %v644 = vld [vmem:[%s5 + $0x30] sm:$0xf]
        %v645 = vld [vmem:[%s5 + $0x34] sm:$0xf]
        %v646 = vld [vmem:[%s5 + $0x38] sm:$0xf]
        %v647 = vld [vmem:[%s5 + $0x3c] sm:$0xf]
        %v648 = vld [vmem:[#allocation3 + $0x1] sm:$0xff]
        %v649 = vpack.c.bf16 %v648, %v648
        %s650 = scalar_lea.vmem %s5, 64
        %v651 = vld [vmem:[%s650] sm:$0xf]
        %v652 = vld [vmem:[%s650 + $0x4] sm:$0xf]
        %v653 = vld [vmem:[%s650 + $0x8] sm:$0xf]
        %v654 = vld [vmem:[%s650 + $0xc] sm:$0xf]
        %v655 = vld [vmem:[%s650 + $0x10] sm:$0xf]
        %v656 = vld [vmem:[%s650 + $0x14] sm:$0xf]
        %v657 = vld [vmem:[%s650 + $0x18] sm:$0xf]
        %v658 = vld [vmem:[%s650 + $0x1c] sm:$0xf]
        %v659 = vld [vmem:[%s650 + $0x20] sm:$0xf]
        %v660 = vld [vmem:[%s650 + $0x24] sm:$0xf]
        %v661 = vld [vmem:[%s650 + $0x28] sm:$0xf]
        %v662 = vld [vmem:[%s650 + $0x2c] sm:$0xf]
        %v663 = vld [vmem:[%s650 + $0x30] sm:$0xf]
        %v664 = vld [vmem:[%s650 + $0x34] sm:$0xf]
        %v665 = vld [vmem:[%s650 + $0x38] sm:$0xf]
        %v666 = vld [vmem:[%s650 + $0x3c] sm:$0xf]
        %v683 = vunpack.c.l.b16 %v651
        %v684 = vunpack.c.l.b16 %v652
        %v685 = vunpack.c.l.b16 %v653
        %v686 = vunpack.c.l.b16 %v654
        %v687 = vunpack.c.l.b16 %v655
        %v688 = vunpack.c.l.b16 %v656
        %v689 = vunpack.c.l.b16 %v657
        %v690 = vunpack.c.l.b16 %v658
        %v691 = vunpack.c.l.b16 %v659
        %v692 = vunpack.c.l.b16 %v660
        %v693 = vunpack.c.l.b16 %v661
        %v694 = vunpack.c.l.b16 %v662
        %v695 = vunpack.c.l.b16 %v663
        %v696 = vunpack.c.l.b16 %v664
        %v697 = vunpack.c.l.b16 %v665
        %v698 = vunpack.c.l.b16 %v666
        %v699 = vpack.c.b16 %v684, %v683
        %v700 = vpack.c.b16 %v686, %v685
        %v701 = vpack.c.b16 %v688, %v687
        %v702 = vpack.c.b16 %v690, %v689
        %v703 = vpack.c.b16 %v692, %v691
        %v704 = vpack.c.b16 %v694, %v693
        %v705 = vpack.c.b16 %v696, %v695
        %v706 = vpack.c.b16 %v698, %v697
        %715 = vmatpush.bf16.msra.mxu0 %v706
        %716 = vmatpush.bf16.msra.mxu0 %v705
        %717 = vmatpush.bf16.msra.mxu0 %v704
        %718 = vmatpush.bf16.msra.mxu0 %v703
        %719 = vmatpush.bf16.msra.mxu0 %v702
        %720 = vmatpush.bf16.msra.mxu0 %v701
        %721 = vmatpush.bf16.msra.mxu0 %v700
        %722 = vmatpush.bf16.msra.mxu0 %v699
        %723 = vmatmul.bf16.gmra.mxu0 %v649
        %v724 = vpop.f32.mrf.mxu0
        %v725 = vadd.f32 0.0, %v724
        %v726 = vpop.f32.mrf.mxu0
        %727 = vdwg.mxu0
        %v744 = vunpack.c.l.b16 %v632
        %v745 = vunpack.c.l.b16 %v633
        %v746 = vunpack.c.l.b16 %v634
        %v747 = vunpack.c.l.b16 %v635
        %v748 = vunpack.c.l.b16 %v636
        %v749 = vunpack.c.l.b16 %v637
        %v750 = vunpack.c.l.b16 %v638
        %v751 = vunpack.c.l.b16 %v639
        %v752 = vunpack.c.l.b16 %v640
        %v753 = vunpack.c.l.b16 %v641
        %v754 = vunpack.c.l.b16 %v642
        %v755 = vunpack.c.l.b16 %v643
        %v756 = vunpack.c.l.b16 %v644
        %v757 = vunpack.c.l.b16 %v645
        %v758 = vunpack.c.l.b16 %v646
        %v759 = vunpack.c.l.b16 %v647
        %v760 = vpack.c.b16 %v745, %v744
        %v761 = vpack.c.b16 %v747, %v746
        %v762 = vpack.c.b16 %v749, %v748
        %v763 = vpack.c.b16 %v751, %v750
        %v764 = vpack.c.b16 %v753, %v752
        %v765 = vpack.c.b16 %v755, %v754
        %v766 = vpack.c.b16 %v757, %v756
        %v767 = vpack.c.b16 %v759, %v758
        %776 = vmatpush.bf16.msra.mxu0 %v767
        %777 = vmatpush.bf16.msra.mxu0 %v766
        %778 = vmatpush.bf16.msra.mxu0 %v765
        %779 = vmatpush.bf16.msra.mxu0 %v764
        %780 = vmatpush.bf16.msra.mxu0 %v763
        %781 = vmatpush.bf16.msra.mxu0 %v762
        %782 = vmatpush.bf16.msra.mxu0 %v761
        %783 = vmatpush.bf16.msra.mxu0 %v760
        %784 = vmatmul.bf16.gmra.mxu0 %v631
        %v785 = vpop.f32.mrf.mxu0
        %v786 = vadd.f32 %v725, %v785
        %v787 = vpop.f32.mrf.mxu0
        %788 = vdwg.mxu0
        %v789 = vld [vmem:[#allocation3 + $0x2] sm:$0xff]
        %v790 = vpack.c.bf16 %v789, %v789
        %s791 = scalar_lea.vmem %s5, 128
        %v792 = vld [vmem:[%s791] sm:$0xf]
        %v793 = vld [vmem:[%s791 + $0x4] sm:$0xf]
        %v794 = vld [vmem:[%s791 + $0x8] sm:$0xf]
        %v795 = vld [vmem:[%s791 + $0xc] sm:$0xf]
        %v796 = vld [vmem:[%s791 + $0x10] sm:$0xf]
        %v797 = vld [vmem:[%s791 + $0x14] sm:$0xf]
        %v798 = vld [vmem:[%s791 + $0x18] sm:$0xf]
        %v799 = vld [vmem:[%s791 + $0x1c] sm:$0xf]
        %v800 = vld [vmem:[%s791 + $0x20] sm:$0xf]
        %v801 = vld [vmem:[%s791 + $0x24] sm:$0xf]
        %v802 = vld [vmem:[%s791 + $0x28] sm:$0xf]
        %v803 = vld [vmem:[%s791 + $0x2c] sm:$0xf]
        %v804 = vld [vmem:[%s791 + $0x30] sm:$0xf]
        %v805 = vld [vmem:[%s791 + $0x34] sm:$0xf]
        %v806 = vld [vmem:[%s791 + $0x38] sm:$0xf]
        %v807 = vld [vmem:[%s791 + $0x3c] sm:$0xf]
        %v824 = vunpack.c.l.b16 %v792
        %v825 = vunpack.c.l.b16 %v793
        %v826 = vunpack.c.l.b16 %v794
        %v827 = vunpack.c.l.b16 %v795
        %v828 = vunpack.c.l.b16 %v796
        %v829 = vunpack.c.l.b16 %v797
        %v830 = vunpack.c.l.b16 %v798
        %v831 = vunpack.c.l.b16 %v799
        %v832 = vunpack.c.l.b16 %v800
        %v833 = vunpack.c.l.b16 %v801
        %v834 = vunpack.c.l.b16 %v802
        %v835 = vunpack.c.l.b16 %v803
        %v836 = vunpack.c.l.b16 %v804
        %v837 = vunpack.c.l.b16 %v805
        %v838 = vunpack.c.l.b16 %v806
        %v839 = vunpack.c.l.b16 %v807
        %v840 = vpack.c.b16 %v825, %v824
        %v841 = vpack.c.b16 %v827, %v826
        %v842 = vpack.c.b16 %v829, %v828
        %v843 = vpack.c.b16 %v831, %v830
        %v844 = vpack.c.b16 %v833, %v832
        %v845 = vpack.c.b16 %v835, %v834
        %v846 = vpack.c.b16 %v837, %v836
        %v847 = vpack.c.b16 %v839, %v838
        %856 = vmatpush.bf16.msra.mxu0 %v847
        %857 = vmatpush.bf16.msra.mxu0 %v846
        %858 = vmatpush.bf16.msra.mxu0 %v845
        %859 = vmatpush.bf16.msra.mxu0 %v844
        %860 = vmatpush.bf16.msra.mxu0 %v843
        %861 = vmatpush.bf16.msra.mxu0 %v842
        %862 = vmatpush.bf16.msra.mxu0 %v841
        %863 = vmatpush.bf16.msra.mxu0 %v840
        %864 = vmatmul.bf16.gmra.mxu0 %v790
        %v865 = vpop.f32.mrf.mxu0
        %v866 = vadd.f32 0.0, %v865
        %v867 = vpop.f32.mrf.mxu0
        %868 = vdwg.mxu0
        %v869 = vadd.f32 %v786, %v866
        %v870 = vld [vmem:[%s6] sm:$0x1]
        %v872 = vperm.slane %v870, 0
        %v874 = vadd.f32 %v869, %v872
        %v875 = vmax.f32 %v874, 0.0
        %876 = vst.msk [vmem:[#allocation4] sm:$0xff] %vm587, 0.0
        %vm877 = vcmask 517120
        %878 = vst.msk [vmem:[#allocation4 + $0x8] sm:$0x3] %vm877, 0.0
        %879 = vst.msk [vmem:[#allocation4 + $0x1] sm:$0xff] %vm587, %v875
        %v880 = vld [vmem:[#allocation4] sm:$0xff]
        %v881 = vpack.c.bf16 %v880, %v880
        %v882 = vld [vmem:[%s7] sm:$0xf]
        %v883 = vld [vmem:[%s7 + $0x4] sm:$0xf]
        %v884 = vld [vmem:[%s7 + $0x8] sm:$0xf]
        %v885 = vld [vmem:[%s7 + $0xc] sm:$0xf]
        %v886 = vld [vmem:[%s7 + $0x10] sm:$0xf]
        %v887 = vld [vmem:[%s7 + $0x14] sm:$0xf]
        %v888 = vld [vmem:[%s7 + $0x18] sm:$0xf]
        %v889 = vld [vmem:[%s7 + $0x1c] sm:$0xf]
        %v890 = vld [vmem:[#allocation4 + $0x1] sm:$0xff]
        %v891 = vpack.c.bf16 %v890, %v890
        %s892 = scalar_lea.vmem %s7, 32
        %v893 = vld [vmem:[%s892] sm:$0xf]
        %v894 = vld [vmem:[%s892 + $0x4] sm:$0xf]
        %v895 = vld [vmem:[%s892 + $0x8] sm:$0xf]
        %v896 = vld [vmem:[%s892 + $0xc] sm:$0xf]
        %v897 = vld [vmem:[%s892 + $0x10] sm:$0xf]
        %v898 = vld [vmem:[%s892 + $0x14] sm:$0xf]
        %v899 = vld [vmem:[%s892 + $0x18] sm:$0xf]
        %v900 = vld [vmem:[%s892 + $0x1c] sm:$0xf]
        %v909 = vunpack.c.l.b16 %v893
        %v910 = vunpack.c.l.b16 %v894
        %v911 = vunpack.c.l.b16 %v895
        %v912 = vunpack.c.l.b16 %v896
        %v913 = vunpack.c.l.b16 %v897
        %v914 = vunpack.c.l.b16 %v898
        %v915 = vunpack.c.l.b16 %v899
        %v916 = vunpack.c.l.b16 %v900
        %v917 = vpack.c.b16 %v910, %v909
        %v918 = vpack.c.b16 %v912, %v911
        %v919 = vpack.c.b16 %v914, %v913
        %v920 = vpack.c.b16 %v916, %v915
        %v926 = vsel %vm587, %v891, 0
        %928 = vmatpush.bf16.msra.mxu0 0
        %929 = vmatpush.bf16.msra.mxu0 0
        %930 = vmatpush.bf16.msra.mxu0 0
        %931 = vmatpush.bf16.msra.mxu0 0
        %932 = vmatpush.bf16.msra.mxu0 %v920
        %933 = vmatpush.bf16.msra.mxu0 %v919
        %934 = vmatpush.bf16.msra.mxu0 %v918
        %935 = vmatpush.bf16.msra.mxu0 %v917
        %936 = vmatmul.bf16.gmra.mxu0 %v926
        %v937 = vpop.f32.mrf.mxu0
        %v938 = vadd.f32 0.0, %v937
        %v939 = vpop.f32.mrf.mxu0
        %940 = vdwg.mxu0
        %v949 = vunpack.c.l.b16 %v882
        %v950 = vunpack.c.l.b16 %v883
        %v951 = vunpack.c.l.b16 %v884
        %v952 = vunpack.c.l.b16 %v885
        %v953 = vunpack.c.l.b16 %v886
        %v954 = vunpack.c.l.b16 %v887
        %v955 = vunpack.c.l.b16 %v888
        %v956 = vunpack.c.l.b16 %v889
        %v957 = vpack.c.b16 %v950, %v949
        %v958 = vpack.c.b16 %v952, %v951
        %v959 = vpack.c.b16 %v954, %v953
        %v960 = vpack.c.b16 %v956, %v955
        %v966 = vsel %vm587, %v881, 0
        %968 = vmatpush.bf16.msra.mxu0 0
        %969 = vmatpush.bf16.msra.mxu0 0
        %970 = vmatpush.bf16.msra.mxu0 0
        %971 = vmatpush.bf16.msra.mxu0 0
        %972 = vmatpush.bf16.msra.mxu0 %v960
        %973 = vmatpush.bf16.msra.mxu0 %v959
        %974 = vmatpush.bf16.msra.mxu0 %v958
        %975 = vmatpush.bf16.msra.mxu0 %v957
        %976 = vmatmul.bf16.gmra.mxu0 %v966
        %v977 = vpop.f32.mrf.mxu0
        %v978 = vadd.f32 %v938, %v977
        %v979 = vpop.f32.mrf.mxu0
        %980 = vdwg.mxu0
        %v981 = vld [vmem:[#allocation4 + $0x2] sm:$0xff]
        %v982 = vpack.c.bf16 %v981, %v981
        %s983 = scalar_lea.vmem %s7, 64
        %v984 = vld [vmem:[%s983] sm:$0xf]
        %v985 = vld [vmem:[%s983 + $0x4] sm:$0xf]
        %v986 = vld [vmem:[%s983 + $0x8] sm:$0xf]
        %v987 = vld [vmem:[%s983 + $0xc] sm:$0xf]
        %v988 = vld [vmem:[%s983 + $0x10] sm:$0xf]
        %v989 = vld [vmem:[%s983 + $0x14] sm:$0xf]
        %v990 = vld [vmem:[%s983 + $0x18] sm:$0xf]
        %v991 = vld [vmem:[%s983 + $0x1c] sm:$0xf]
        %v1000 = vunpack.c.l.b16 %v984
        %v1001 = vunpack.c.l.b16 %v985
        %v1002 = vunpack.c.l.b16 %v986
        %v1003 = vunpack.c.l.b16 %v987
        %v1004 = vunpack.c.l.b16 %v988
        %v1005 = vunpack.c.l.b16 %v989
        %v1006 = vunpack.c.l.b16 %v990
        %v1007 = vunpack.c.l.b16 %v991
        %v1008 = vpack.c.b16 %v1001, %v1000
        %v1009 = vpack.c.b16 %v1003, %v1002
        %v1010 = vpack.c.b16 %v1005, %v1004
        %v1011 = vpack.c.b16 %v1007, %v1006
        %v1017 = vsel %vm587, %v982, 0
        %1019 = vmatpush.bf16.msra.mxu0 0
        %1020 = vmatpush.bf16.msra.mxu0 0
        %1021 = vmatpush.bf16.msra.mxu0 0
        %1022 = vmatpush.bf16.msra.mxu0 0
        %1023 = vmatpush.bf16.msra.mxu0 %v1011
        %1024 = vmatpush.bf16.msra.mxu0 %v1010
        %1025 = vmatpush.bf16.msra.mxu0 %v1009
        %1026 = vmatpush.bf16.msra.mxu0 %v1008
        %1027 = vmatmul.bf16.gmra.mxu0 %v1017
        %v1028 = vpop.f32.mrf.mxu0
        %v1029 = vadd.f32 0.0, %v1028
        %v1030 = vpop.f32.mrf.mxu0
        %1031 = vdwg.mxu0
        %v1032 = vadd.f32 %v978, %v1029
        %v1033 = vld [vmem:[%s8] sm:$0x1]
        %v1035 = vperm.slane %v1033, 0
        %v1037 = vadd.f32 %v1032, %v1035
        %v1038 = vmax.f32 %v1037, 0.0
        %1039 = vst.msk [vmem:[#allocation5] sm:$0xff] %vm587, 0.0
        %1040 = vst.msk [vmem:[#allocation5 + $0x8] sm:$0x3] %vm877, 0.0
        %1041 = vst.msk [vmem:[#allocation5 + $0x1] sm:$0xff] %vm587, %v1038
        %v1042 = vld [vmem:[#allocation5] sm:$0xff]
        %v1043 = vpack.c.bf16 %v1042, %v1042
        %v1044 = vld [vmem:[%s9] sm:$0xf]
        %v1045 = vld [vmem:[%s9 + $0x4] sm:$0xf]
        %v1046 = vld [vmem:[%s9 + $0x8] sm:$0xf]
        %v1047 = vld [vmem:[%s9 + $0xc] sm:$0xf]
        %v1048 = vld [vmem:[%s9 + $0x10] sm:$0xf]
        %v1049 = vld [vmem:[%s9 + $0x14] sm:$0xf]
        %v1050 = vld [vmem:[%s9 + $0x18] sm:$0xf]
        %v1051 = vld [vmem:[%s9 + $0x1c] sm:$0xf]
        %v1052 = vld [vmem:[#allocation5 + $0x1] sm:$0xff]
        %v1053 = vpack.c.bf16 %v1052, %v1052
        %s1054 = scalar_lea.vmem %s9, 32
        %v1055 = vld [vmem:[%s1054] sm:$0xf]
        %v1056 = vld [vmem:[%s1054 + $0x4] sm:$0xf]
        %v1057 = vld [vmem:[%s1054 + $0x8] sm:$0xf]
        %v1058 = vld [vmem:[%s1054 + $0xc] sm:$0xf]
        %v1059 = vld [vmem:[%s1054 + $0x10] sm:$0xf]
        %v1060 = vld [vmem:[%s1054 + $0x14] sm:$0xf]
        %v1061 = vld [vmem:[%s1054 + $0x18] sm:$0xf]
        %v1062 = vld [vmem:[%s1054 + $0x1c] sm:$0xf]
        %v1071 = vunpack.c.l.b16 %v1055
        %v1072 = vunpack.c.l.b16 %v1056
        %v1073 = vunpack.c.l.b16 %v1057
        %v1074 = vunpack.c.l.b16 %v1058
        %v1075 = vunpack.c.l.b16 %v1059
        %v1076 = vunpack.c.l.b16 %v1060
        %v1077 = vunpack.c.l.b16 %v1061
        %v1078 = vunpack.c.l.b16 %v1062
        %v1079 = vpack.c.b16 %v1072, %v1071
        %v1080 = vpack.c.b16 %v1074, %v1073
        %v1081 = vpack.c.b16 %v1076, %v1075
        %v1082 = vpack.c.b16 %v1078, %v1077
        %v1088 = vsel %vm587, %v1053, 0
        %1090 = vmatpush.bf16.msra.mxu0 0
        %1091 = vmatpush.bf16.msra.mxu0 0
        %1092 = vmatpush.bf16.msra.mxu0 0
        %1093 = vmatpush.bf16.msra.mxu0 0
        %1094 = vmatpush.bf16.msra.mxu0 %v1082
        %1095 = vmatpush.bf16.msra.mxu0 %v1081
        %1096 = vmatpush.bf16.msra.mxu0 %v1080
        %1097 = vmatpush.bf16.msra.mxu0 %v1079
        %1098 = vmatmul.bf16.gmra.mxu0 %v1088
        %v1099 = vpop.f32.mrf.mxu0
        %v1100 = vadd.f32 0.0, %v1099
        %v1101 = vpop.f32.mrf.mxu0
        %1102 = vdwg.mxu0
        %v1111 = vunpack.c.l.b16 %v1044
        %v1112 = vunpack.c.l.b16 %v1045
        %v1113 = vunpack.c.l.b16 %v1046
        %v1114 = vunpack.c.l.b16 %v1047
        %v1115 = vunpack.c.l.b16 %v1048
        %v1116 = vunpack.c.l.b16 %v1049
        %v1117 = vunpack.c.l.b16 %v1050
        %v1118 = vunpack.c.l.b16 %v1051
        %v1119 = vpack.c.b16 %v1112, %v1111
        %v1120 = vpack.c.b16 %v1114, %v1113
        %v1121 = vpack.c.b16 %v1116, %v1115
        %v1122 = vpack.c.b16 %v1118, %v1117
        %v1128 = vsel %vm587, %v1043, 0
        %1130 = vmatpush.bf16.msra.mxu0 0
        %1131 = vmatpush.bf16.msra.mxu0 0
        %1132 = vmatpush.bf16.msra.mxu0 0
        %1133 = vmatpush.bf16.msra.mxu0 0
        %1134 = vmatpush.bf16.msra.mxu0 %v1122
        %1135 = vmatpush.bf16.msra.mxu0 %v1121
        %1136 = vmatpush.bf16.msra.mxu0 %v1120
        %1137 = vmatpush.bf16.msra.mxu0 %v1119
        %1138 = vmatmul.bf16.gmra.mxu0 %v1128
        %v1139 = vpop.f32.mrf.mxu0
        %v1140 = vadd.f32 %v1100, %v1139
        %v1141 = vpop.f32.mrf.mxu0
        %1142 = vdwg.mxu0
        %v1143 = vld [vmem:[#allocation5 + $0x2] sm:$0xff]
        %v1144 = vpack.c.bf16 %v1143, %v1143
        %s1145 = scalar_lea.vmem %s9, 64
        %v1146 = vld [vmem:[%s1145] sm:$0xf]
        %v1147 = vld [vmem:[%s1145 + $0x4] sm:$0xf]
        %v1148 = vld [vmem:[%s1145 + $0x8] sm:$0xf]
        %v1149 = vld [vmem:[%s1145 + $0xc] sm:$0xf]
        %v1150 = vld [vmem:[%s1145 + $0x10] sm:$0xf]
        %v1151 = vld [vmem:[%s1145 + $0x14] sm:$0xf]
        %v1152 = vld [vmem:[%s1145 + $0x18] sm:$0xf]
        %v1153 = vld [vmem:[%s1145 + $0x1c] sm:$0xf]
        %v1162 = vunpack.c.l.b16 %v1146
        %v1163 = vunpack.c.l.b16 %v1147
        %v1164 = vunpack.c.l.b16 %v1148
        %v1165 = vunpack.c.l.b16 %v1149
        %v1166 = vunpack.c.l.b16 %v1150
        %v1167 = vunpack.c.l.b16 %v1151
        %v1168 = vunpack.c.l.b16 %v1152
        %v1169 = vunpack.c.l.b16 %v1153
        %v1170 = vpack.c.b16 %v1163, %v1162
        %v1171 = vpack.c.b16 %v1165, %v1164
        %v1172 = vpack.c.b16 %v1167, %v1166
        %v1173 = vpack.c.b16 %v1169, %v1168
        %v1179 = vsel %vm587, %v1144, 0
        %1181 = vmatpush.bf16.msra.mxu0 0
        %1182 = vmatpush.bf16.msra.mxu0 0
        %1183 = vmatpush.bf16.msra.mxu0 0
        %1184 = vmatpush.bf16.msra.mxu0 0
        %1185 = vmatpush.bf16.msra.mxu0 %v1173
        %1186 = vmatpush.bf16.msra.mxu0 %v1172
        %1187 = vmatpush.bf16.msra.mxu0 %v1171
        %1188 = vmatpush.bf16.msra.mxu0 %v1170
        %1189 = vmatmul.bf16.gmra.mxu0 %v1179
        %v1190 = vpop.f32.mrf.mxu0
        %v1191 = vadd.f32 0.0, %v1190
        %v1192 = vpop.f32.mrf.mxu0
        %1193 = vdwg.mxu0
        %v1194 = vadd.f32 %v1140, %v1191
        %v1195 = vld [vmem:[%s10] sm:$0x1]
        %v1197 = vperm.slane %v1195, 0
        %v1199 = vadd.f32 %v1194, %v1197
        %v1200 = vadd.f32 %v1199, %v875
        %v1201 = vmax.f32 %v1200, 0.0
        %1202 = vst.msk [vmem:[#allocation6] sm:$0xff] %vm587, 0.0
        %vm1203 = vcmask 519168
        %1204 = vst.msk [vmem:[#allocation6 + $0x8] sm:$0xf] %vm1203, 0.0
        %1205 = vst.msk [vmem:[#allocation6 + $0x2] sm:$0xff] %vm587, %v1201
        %v1206 = vld [vmem:[#allocation6] sm:$0xff]
        %v1207 = vpack.c.bf16 %v1206, %v1206
        %v1208 = vld [vmem:[%s11] sm:$0xf]
        %v1209 = vld [vmem:[%s11 + $0x4] sm:$0xf]
        %v1210 = vld [vmem:[%s11 + $0x8] sm:$0xf]
        %v1211 = vld [vmem:[%s11 + $0xc] sm:$0xf]
        %v1212 = vld [vmem:[%s11 + $0x10] sm:$0xf]
        %v1213 = vld [vmem:[%s11 + $0x14] sm:$0xf]
        %v1214 = vld [vmem:[%s11 + $0x18] sm:$0xf]
        %v1215 = vld [vmem:[%s11 + $0x1c] sm:$0xf]
        %v1216 = vld [vmem:[#allocation6 + $0x1] sm:$0xff]
        %v1217 = vpack.c.bf16 %v1216, %v1216
        %s1218 = scalar_lea.vmem %s11, 32
        %v1219 = vld [vmem:[%s1218] sm:$0xf]
        %v1220 = vld [vmem:[%s1218 + $0x4] sm:$0xf]
        %v1221 = vld [vmem:[%s1218 + $0x8] sm:$0xf]
        %v1222 = vld [vmem:[%s1218 + $0xc] sm:$0xf]
        %v1223 = vld [vmem:[%s1218 + $0x10] sm:$0xf]
        %v1224 = vld [vmem:[%s1218 + $0x14] sm:$0xf]
        %v1225 = vld [vmem:[%s1218 + $0x18] sm:$0xf]
        %v1226 = vld [vmem:[%s1218 + $0x1c] sm:$0xf]
        %v1235 = vunpack.c.l.b16 %v1219
        %v1236 = vunpack.c.l.b16 %v1220
        %v1237 = vunpack.c.l.b16 %v1221
        %v1238 = vunpack.c.l.b16 %v1222
        %v1239 = vunpack.c.l.b16 %v1223
        %v1240 = vunpack.c.l.b16 %v1224
        %v1241 = vunpack.c.l.b16 %v1225
        %v1242 = vunpack.c.l.b16 %v1226
        %v1243 = vpack.c.b16 %v1236, %v1235
        %v1244 = vpack.c.b16 %v1238, %v1237
        %v1245 = vpack.c.b16 %v1240, %v1239
        %v1246 = vpack.c.b16 %v1242, %v1241
        %v1252 = vsel %vm587, %v1217, 0
        %1254 = vmatpush.bf16.msra.mxu0 0
        %1255 = vmatpush.bf16.msra.mxu0 0
        %1256 = vmatpush.bf16.msra.mxu0 0
        %1257 = vmatpush.bf16.msra.mxu0 0
        %1258 = vmatpush.bf16.msra.mxu0 %v1246
        %1259 = vmatpush.bf16.msra.mxu0 %v1245
        %1260 = vmatpush.bf16.msra.mxu0 %v1244
        %1261 = vmatpush.bf16.msra.mxu0 %v1243
        %1262 = vmatmul.bf16.gmra.mxu0 %v1252
        %v1263 = vpop.f32.mrf.mxu0
        %v1264 = vadd.f32 0.0, %v1263
        %v1265 = vpop.f32.mrf.mxu0
        %1266 = vdwg.mxu0
        %v1275 = vunpack.c.l.b16 %v1208
        %v1276 = vunpack.c.l.b16 %v1209
        %v1277 = vunpack.c.l.b16 %v1210
        %v1278 = vunpack.c.l.b16 %v1211
        %v1279 = vunpack.c.l.b16 %v1212
        %v1280 = vunpack.c.l.b16 %v1213
        %v1281 = vunpack.c.l.b16 %v1214
        %v1282 = vunpack.c.l.b16 %v1215
        %v1283 = vpack.c.b16 %v1276, %v1275
        %v1284 = vpack.c.b16 %v1278, %v1277
        %v1285 = vpack.c.b16 %v1280, %v1279
        %v1286 = vpack.c.b16 %v1282, %v1281
        %v1292 = vsel %vm587, %v1207, 0
        %1294 = vmatpush.bf16.msra.mxu0 0
        %1295 = vmatpush.bf16.msra.mxu0 0
        %1296 = vmatpush.bf16.msra.mxu0 0
        %1297 = vmatpush.bf16.msra.mxu0 0
        %1298 = vmatpush.bf16.msra.mxu0 %v1286
        %1299 = vmatpush.bf16.msra.mxu0 %v1285
        %1300 = vmatpush.bf16.msra.mxu0 %v1284
        %1301 = vmatpush.bf16.msra.mxu0 %v1283
        %1302 = vmatmul.bf16.gmra.mxu0 %v1292
        %v1303 = vpop.f32.mrf.mxu0
        %v1304 = vadd.f32 %v1264, %v1303
        %v1305 = vpop.f32.mrf.mxu0
        %1306 = vdwg.mxu0
        %v1307 = vld [vmem:[#allocation6 + $0x2] sm:$0xff]
        %v1308 = vpack.c.bf16 %v1307, %v1307
        %s1309 = scalar_lea.vmem %s11, 64
        %v1310 = vld [vmem:[%s1309] sm:$0xf]
        %v1311 = vld [vmem:[%s1309 + $0x4] sm:$0xf]
        %v1312 = vld [vmem:[%s1309 + $0x8] sm:$0xf]
        %v1313 = vld [vmem:[%s1309 + $0xc] sm:$0xf]
        %v1314 = vld [vmem:[%s1309 + $0x10] sm:$0xf]
        %v1315 = vld [vmem:[%s1309 + $0x14] sm:$0xf]
        %v1316 = vld [vmem:[%s1309 + $0x18] sm:$0xf]
        %v1317 = vld [vmem:[%s1309 + $0x1c] sm:$0xf]
        %v1326 = vunpack.c.l.b16 %v1310
        %v1327 = vunpack.c.l.b16 %v1311
        %v1328 = vunpack.c.l.b16 %v1312
        %v1329 = vunpack.c.l.b16 %v1313
        %v1330 = vunpack.c.l.b16 %v1314
        %v1331 = vunpack.c.l.b16 %v1315
        %v1332 = vunpack.c.l.b16 %v1316
        %v1333 = vunpack.c.l.b16 %v1317
        %v1334 = vpack.c.b16 %v1327, %v1326
        %v1335 = vpack.c.b16 %v1329, %v1328
        %v1336 = vpack.c.b16 %v1331, %v1330
        %v1337 = vpack.c.b16 %v1333, %v1332
        %v1343 = vsel %vm587, %v1308, 0
        %1345 = vmatpush.bf16.msra.mxu0 0
        %1346 = vmatpush.bf16.msra.mxu0 0
        %1347 = vmatpush.bf16.msra.mxu0 0
        %1348 = vmatpush.bf16.msra.mxu0 0
        %1349 = vmatpush.bf16.msra.mxu0 %v1337
        %1350 = vmatpush.bf16.msra.mxu0 %v1336
        %1351 = vmatpush.bf16.msra.mxu0 %v1335
        %1352 = vmatpush.bf16.msra.mxu0 %v1334
        %1353 = vmatmul.bf16.gmra.mxu0 %v1343
        %v1354 = vpop.f32.mrf.mxu0
        %v1355 = vadd.f32 0.0, %v1354
        %v1356 = vpop.f32.mrf.mxu0
        %1357 = vdwg.mxu0
        %v1358 = vadd.f32 %v1304, %v1355
        %v1359 = vld [vmem:[#allocation6 + $0x3] sm:$0xff]
        %v1360 = vpack.c.bf16 %v1359, %v1359
        %s1361 = scalar_lea.vmem %s11, 96
        %v1362 = vld [vmem:[%s1361] sm:$0xf]
        %v1363 = vld [vmem:[%s1361 + $0x4] sm:$0xf]
        %v1364 = vld [vmem:[%s1361 + $0x8] sm:$0xf]
        %v1365 = vld [vmem:[%s1361 + $0xc] sm:$0xf]
        %v1366 = vld [vmem:[%s1361 + $0x10] sm:$0xf]
        %v1367 = vld [vmem:[%s1361 + $0x14] sm:$0xf]
        %v1368 = vld [vmem:[%s1361 + $0x18] sm:$0xf]
        %v1369 = vld [vmem:[%s1361 + $0x1c] sm:$0xf]
        %v1378 = vunpack.c.l.b16 %v1362
        %v1379 = vunpack.c.l.b16 %v1363
        %v1380 = vunpack.c.l.b16 %v1364
        %v1381 = vunpack.c.l.b16 %v1365
        %v1382 = vunpack.c.l.b16 %v1366
        %v1383 = vunpack.c.l.b16 %v1367
        %v1384 = vunpack.c.l.b16 %v1368
        %v1385 = vunpack.c.l.b16 %v1369
        %v1386 = vpack.c.b16 %v1379, %v1378
        %v1387 = vpack.c.b16 %v1381, %v1380
        %v1388 = vpack.c.b16 %v1383, %v1382
        %v1389 = vpack.c.b16 %v1385, %v1384
        %v1395 = vsel %vm587, %v1360, 0
        %1397 = vmatpush.bf16.msra.mxu0 0
        %1398 = vmatpush.bf16.msra.mxu0 0
        %1399 = vmatpush.bf16.msra.mxu0 0
        %1400 = vmatpush.bf16.msra.mxu0 0
        %1401 = vmatpush.bf16.msra.mxu0 %v1389
        %1402 = vmatpush.bf16.msra.mxu0 %v1388
        %1403 = vmatpush.bf16.msra.mxu0 %v1387
        %1404 = vmatpush.bf16.msra.mxu0 %v1386
        %1405 = vmatmul.bf16.gmra.mxu0 %v1395
        %v1406 = vpop.f32.mrf.mxu0
        %v1407 = vadd.f32 0.0, %v1406
        %v1408 = vpop.f32.mrf.mxu0
        %1409 = vdwg.mxu0
        %v1410 = vadd.f32 %v1358, %v1407
        %v1411 = vld [vmem:[#allocation6 + $0x4] sm:$0xff]
        %v1412 = vpack.c.bf16 %v1411, %v1411
        %s1413 = scalar_lea.vmem %s11, 128
        %v1414 = vld [vmem:[%s1413] sm:$0xf]
        %v1415 = vld [vmem:[%s1413 + $0x4] sm:$0xf]
        %v1416 = vld [vmem:[%s1413 + $0x8] sm:$0xf]
        %v1417 = vld [vmem:[%s1413 + $0xc] sm:$0xf]
        %v1418 = vld [vmem:[%s1413 + $0x10] sm:$0xf]
        %v1419 = vld [vmem:[%s1413 + $0x14] sm:$0xf]
        %v1420 = vld [vmem:[%s1413 + $0x18] sm:$0xf]
        %v1421 = vld [vmem:[%s1413 + $0x1c] sm:$0xf]
        %v1430 = vunpack.c.l.b16 %v1414
        %v1431 = vunpack.c.l.b16 %v1415
        %v1432 = vunpack.c.l.b16 %v1416
        %v1433 = vunpack.c.l.b16 %v1417
        %v1434 = vunpack.c.l.b16 %v1418
        %v1435 = vunpack.c.l.b16 %v1419
        %v1436 = vunpack.c.l.b16 %v1420
        %v1437 = vunpack.c.l.b16 %v1421
        %v1438 = vpack.c.b16 %v1431, %v1430
        %v1439 = vpack.c.b16 %v1433, %v1432
        %v1440 = vpack.c.b16 %v1435, %v1434
        %v1441 = vpack.c.b16 %v1437, %v1436
        %v1447 = vsel %vm587, %v1412, 0
        %1449 = vmatpush.bf16.msra.mxu0 0
        %1450 = vmatpush.bf16.msra.mxu0 0
        %1451 = vmatpush.bf16.msra.mxu0 0
        %1452 = vmatpush.bf16.msra.mxu0 0
        %1453 = vmatpush.bf16.msra.mxu0 %v1441
        %1454 = vmatpush.bf16.msra.mxu0 %v1440
        %1455 = vmatpush.bf16.msra.mxu0 %v1439
        %1456 = vmatpush.bf16.msra.mxu0 %v1438
        %1457 = vmatmul.bf16.gmra.mxu0 %v1447
        %v1458 = vpop.f32.mrf.mxu0
        %v1459 = vadd.f32 0.0, %v1458
        %v1460 = vpop.f32.mrf.mxu0
        %1461 = vdwg.mxu0
        %v1462 = vadd.f32 %v1410, %v1459
        %v1463 = vld [vmem:[%s12] sm:$0x1]
        %v1465 = vperm.slane %v1463, 0
        %v1467 = vadd.f32 %v1462, %v1465
        %v1468 = vtanh.pop %v1467
        %vm1469 = vcmask 195584
        %1470 = vst.msk [vmem:[%s431] sm:$0xff] %vm1469, %v1468
        %s1471 = sand.u32 %s313, 1
        %s1472 = scalar_lea.sflag [#allocation8], %s1471
        %s1473 = sand.u32 %s313, 1
        %s1474 = smul.addr %s1473, 8
        %s1475 = scalar_lea.vmem [#allocation7], %s1474
        // Predicated region
        $region73: #{tpu_custom_call.1} parent=71 // pred_check
          %p1476 = pneg %p323
        $region74: #{tpu_custom_call.1} parent=71 // pred_check_branch
          %1478 = sbr.rel (%p1476) target = $region76
        $region75: #{tpu_custom_call.1} parent=71 // pred_region
          %1480 = vsyncadd %s1472, 0
          %s1481 = smul.addr %s27, 8
          %s1482 = scalar_lea.hbm %s13, %s1481
          %s1484 = sshll.u32 %s1475, 4
          %s1485 = int_to_ptr.vmem [resolvable:$true] %s1484
          %s1486 = sshll.u32 %s1482, 4
          %s1487 = int_to_ptr.hbm [resolvable:$true] %s1486
          %1489 = dma.vmem_to_hbm [thread:$0]  %s1485, 128, %s1487, %s1472
        $region76: #{tpu_custom_call.1} parent=71 // pred_fallthru
          _
      $region72: #{tpu_custom_call.1} parent=5 // pred_fallthru
        _
      %p1490 = scmp.le.s32.totalorder 2, %s22
      // Predicated region
      $region77: #{tpu_custom_call.1} parent=5 // pred_check
        %p1491 = pneg %p1490
      $region78: #{tpu_custom_call.1} parent=5 // pred_check_branch
        %1493 = sbr.rel (%p1491) target = $region80
      $region79: #{tpu_custom_call.1} parent=5 // pred_region
        %s1494 = ssub.s32 %s22, 2
        // Predicated region
        $region81: #{tpu_custom_call.1} parent=79 // pred_check
          %p1495 = pneg %p329
        $region82: #{tpu_custom_call.1} parent=79 // pred_check_branch
          %1497 = sbr.rel (%p1495) target = $region84
        $region83: #{tpu_custom_call.1} parent=79 // pred_region
          %s1498 = sand.u32 %s314, 1
          %s1499 = scalar_lea.sflag [#allocation8], %s1498
          %s1500 = sand.u32 %s314, 1
          %s1501 = smul.addr %s1500, 8
          %s1502 = scalar_lea.vmem [#allocation7], %s1501
          %1504 = dma.done %s1499, 128
        $region84: #{tpu_custom_call.1} parent=79 // pred_fallthru
          _
      $region80: #{tpu_custom_call.1} parent=5 // pred_fallthru
        _
    $region6: #{tpu_custom_call.1} parent=1 // loop_footer
      %s26 = sadd.s32 1, %s22
    $region7: #{tpu_custom_call.1} parent=1 // loop_footer_branch
      %21 = sbr.rel target = $region3
    $region8: #{tpu_custom_call.1} parent=1 // loop_exit
      _
    %1505 = vsyncpa [#allocation8], 1
    %s1506 = scalar_lea.sflag [#allocation8], 1
    %1507 = vsyncpa %s1506, 1

</llo_original>
